<compile_context>
chip_gen: v7x
topology: tpu7x:2x2x1
jax: 0.10.0
libtpu: 0.0.40
codegen_flags: <defaults>
</compile_context>

<pallas_src>
import functools

import jax
import jax.numpy as jnp
from jax.experimental import pallas as pl
from jax.experimental.pallas import tpu as pltpu


def _cdiv(a, b):
    return -(-a // b)


def _round_up(x, m):
    return _cdiv(x, m) * m


def _mlp_cat_kernel(xi_ref, xj_ref, *rest, num_layers):
    # rest = (W0_top, W0_bot, b0, W1, b1, ..., W_{L-1}, b_{L-1}, out_tile)
    out_ref = rest[-1]
    params = rest[:-1]

    xi = xi_ref[...]
    xj = xj_ref[...]
    tm = xi.shape[0]

    w0_top = params[0][...]
    w0_bot = params[1][...]
    b0 = params[2][...]

    # Stack the two branches along rows: rows [0:tm] correspond to cat([xi, xj]),
    # rows [tm:2tm] to cat([xj, xi]).  The concat along the feature axis is fused
    # into layer 0 via the split weight.
    x_top = jnp.concatenate([xi, xj], axis=0)  # (2*tm, c)
    x_bot = jnp.concatenate([xj, xi], axis=0)  # (2*tm, c)

    h = (
        jnp.dot(x_top.astype(w0_top.dtype), w0_top, preferred_element_type=jnp.float32)
        + jnp.dot(x_bot.astype(w0_bot.dtype), w0_bot, preferred_element_type=jnp.float32)
        + b0
    )

    if num_layers == 1:
        # Single affine layer: just average the two branches.
        out_ref[...] = (0.5 * (h[:tm] + h[tm:])).astype(out_ref.dtype)
        return

    h = jnp.maximum(h, 0.0)  # ReLU (dropout = identity in eval mode)

    idx = 3
    for _ in range(num_layers - 2):
        w = params[idx][...]
        b = params[idx + 1][...]
        idx += 2
        h = jnp.dot(h.astype(w.dtype), w, preferred_element_type=jnp.float32) + b
        h = jnp.maximum(h, 0.0)

    # Final layer is affine => average the branches BEFORE the last matmul.
    w_last = params[idx][...]
    b_last = params[idx + 1][...]
    h_avg = 0.5 * (h[:tm] + h[tm:])
    y = jnp.dot(h_avg.astype(w_last.dtype), w_last, preferred_element_type=jnp.float32) + b_last
    out_ref[...] = y.astype(out_ref.dtype)


def mlp_cat_forward(x_i, x_j, weights, biases, *, dropout_p=0.0, training=False,
                    tm_target=512, compute_dtype=jnp.bfloat16):
    """Replicates MLPCatPredictor.forward (eval mode) with one fused Pallas kernel.

    weights[l]: [fan_in, fan_out] (transposed vs. torch.nn.Linear.weight),
    biases[l]:  [1, fan_out].
    """
    del dropout_p, training  # eval-mode dropout is the identity
    num_layers = len(weights)
    assert num_layers >= 1
    b, c = x_i.shape
    assert weights[0].shape[0] == 2 * c
    out_ch = weights[-1].shape[1]

    # ---- Parameters: split W0 so the concat is fused into the first matmul. ----
    # (Matmul operands in bf16, f32 accumulation; biases stay f32 for the VPU add.)
    w0 = weights[0]
    params = [
        w0[:c].astype(compute_dtype),          # W0_top
        w0[c:].astype(compute_dtype),          # W0_bot
        biases[0].astype(jnp.float32),
    ]
    for w, bb in zip(weights[1:], biases[1:]):
        params.append(w.astype(compute_dtype))
        params.append(bb.astype(jnp.float32))

    # ---- Row tiling: minimize padding waste; >=2 tiles for megacore when possible. ----
    n_tiles = max(1, _cdiv(b, tm_target))
    if n_tiles == 1 and b > 128:
        n_tiles = 2  # v7x has 2 TensorCores; give each one a tile.
    tm = _round_up(_cdiv(b, n_tiles), 8)
    b_pad = n_tiles * tm

    xi = x_i.astype(jnp.float32)
    xj = x_j.astype(jnp.float32)
    if b_pad != b:
        pad = ((0, b_pad - b), (0, 0))
        xi = jnp.pad(xi, pad)
        xj = jnp.pad(xj, pad)

    in_specs = [
        pl.BlockSpec((tm, c), lambda i: (i, 0)),   # x_i row tile
        pl.BlockSpec((tm, c), lambda i: (i, 0)),   # x_j row tile
    ]
    for p in params:
        # Grid-invariant full blocks: weights/biases stay VMEM-resident.
        in_specs.append(pl.BlockSpec(p.shape, lambda i: (0, 0)))

    # ---- Advisory cost estimate for XLA's scheduler. ----
    flops = 2 * (2 * b_pad) * (2 * c) * weights[0].shape[1]          # layer 0, both branches
    for l in range(1, num_layers - 1):
        flops += 2 * (2 * b_pad) * weights[l].shape[0] * weights[l].shape[1]
    if num_layers >= 2:
        flops += 2 * b_pad * weights[-1].shape[0] * weights[-1].shape[1]  # final, applied once
    bytes_accessed = (xi.size + xj.size + b_pad * out_ch) * 4 + sum(int(p.nbytes) for p in params)

    out = pl.pallas_call(
        functools.partial(_mlp_cat_kernel, num_layers=num_layers),
        out_shape=jax.ShapeDtypeStruct((b_pad, out_ch), jnp.float32),
        grid_spec=pltpu.PrefetchScalarGridSpec(
            num_scalar_prefetch=0,
            grid=(n_tiles,),
            in_specs=in_specs,
            out_specs=pl.BlockSpec((tm, out_ch), lambda i: (i, 0)),
        ),
        compiler_params=pltpu.CompilerParams(
            dimension_semantics=("parallel",),
            # NOTE: for very large tm (>~2048) on v5e, set vmem_limit_bytes explicitly.
        ),
        cost_estimate=pl.CostEstimate(
            flops=flops, transcendentals=0, bytes_accessed=bytes_accessed),
    )(xi, xj, *params)

    if b_pad != b:
        out = out[:b]
    return out


def _reference_forward(x_i, x_j, weights, biases):
    """Pure-JAX f32 replica of the PyTorch module (eval mode)."""
    x1 = jnp.concatenate([x_i, x_j], axis=-1)
    x2 = jnp.concatenate([x_j, x_i], axis=-1)
    for w, b in zip(weights[:-1], biases[:-1]):
        x1 = jnp.maximum(x1 @ w + b, 0.0)
        x2 = jnp.maximum(x2 @ w + b, 0.0)
    x1 = x1 @ weights[-1] + biases[-1]
    x2 = x2 @ weights[-1] + biases[-1]
    return (x1 + x2) / 2


if __name__ == "__main__":
    key = jax.random.PRNGKey(0)

    B = 300            # number of (i, j) node pairs (exercises row padding: 300 -> 2x152)
    IN_CH = 64         # in_channels -> concatenated input dim = 128
    HID = 128          # hidden_channels
    OUT_CH = 1         # out_channels (written at real width, no lane padding)
    NUM_LAYERS = 3
    DROPOUT = 0.5      # identity in eval mode

    keys = jax.random.split(key, 2 + 2 * NUM_LAYERS)
    x_i = jax.random.normal(keys[0], (B, IN_CH), dtype=jnp.float32)
    x_j = jax.random.normal(keys[1], (B, IN_CH), dtype=jnp.float32)

    dims = [2 * IN_CH] + [HID] * (NUM_LAYERS - 1) + [OUT_CH]
    weights, biases = [], []
    for layer in range(NUM_LAYERS):
        fan_in, fan_out = dims[layer], dims[layer + 1]
        w = jax.random.normal(keys[2 + 2 * layer], (fan_in, fan_out),
                              dtype=jnp.float32) * (1.0 / jnp.sqrt(fan_in))
        bb = jax.random.normal(keys[3 + 2 * layer], (1, fan_out),
                               dtype=jnp.float32) * 0.01
        weights.append(w)
        biases.append(bb)

    out = mlp_cat_forward(x_i, x_j, weights, biases,
                          dropout_p=DROPOUT, training=False)
    out = jax.block_until_ready(out)

    ref = _reference_forward(x_i, x_j, weights, biases)
    assert out.shape == (B, OUT_CH)
    # bf16 matmul operands with f32 accumulation -> loosened tolerance vs. f32 reference.
    assert jnp.allclose(out, ref, atol=5e-2, rtol=5e-2), "mismatch vs reference"

    print("KERNEL_OK")
</pallas_src>

<mosaic_0001>
module attributes {stable_mosaic.version = 11 : i64} {
  func.func @_mlp_cat_kernel(%arg0: i32, %arg1: memref<152x64xf32, #tpu.memory_space<vmem>>, %arg2: memref<152x64xf32, #tpu.memory_space<vmem>>, %arg3: memref<64x128xbf16, #tpu.memory_space<vmem>>, %arg4: memref<64x128xbf16, #tpu.memory_space<vmem>>, %arg5: memref<1x128xf32, #tpu.memory_space<vmem>>, %arg6: memref<128x128xbf16, #tpu.memory_space<vmem>>, %arg7: memref<1x128xf32, #tpu.memory_space<vmem>>, %arg8: memref<128x1xbf16, #tpu.memory_space<vmem>>, %arg9: memref<1x1xf32, #tpu.memory_space<vmem>>, %arg10: memref<152x1xf32, #tpu.memory_space<vmem>>) attributes {dimension_semantics = [#tpu.dimension_semantics<parallel>], iteration_bounds = array<i64: 2>, scalar_prefetch = 0 : i64, scratch_operands = 0 : i64, tpu.core_type = #tpu.core_type<tc>, window_params = [{transform_indices = @transform_0, window_bounds = array<i64: 152, 64>}, {transform_indices = @transform_1, window_bounds = array<i64: 152, 64>}, {pipeline_mode = #tpu.pipeline_mode<synchronous>, transform_indices = @transform_2, window_bounds = array<i64: 64, 128>}, {pipeline_mode = #tpu.pipeline_mode<synchronous>, transform_indices = @transform_3, window_bounds = array<i64: 64, 128>}, {pipeline_mode = #tpu.pipeline_mode<synchronous>, transform_indices = @transform_4, window_bounds = array<i64: 1, 128>}, {pipeline_mode = #tpu.pipeline_mode<synchronous>, transform_indices = @transform_5, window_bounds = array<i64: 128, 128>}, {pipeline_mode = #tpu.pipeline_mode<synchronous>, transform_indices = @transform_6, window_bounds = array<i64: 1, 128>}, {pipeline_mode = #tpu.pipeline_mode<synchronous>, transform_indices = @transform_7, window_bounds = array<i64: 128, 1>}, {pipeline_mode = #tpu.pipeline_mode<synchronous>, transform_indices = @transform_8, window_bounds = array<i64: 1, 1>}, {transform_indices = @transform_9, window_bounds = array<i64: 152, 1>}]} {
    %c0 = arith.constant 0 : index
    %c0_0 = arith.constant 0 : index
    %0 = vector.load %arg1[%c0, %c0_0] : memref<152x64xf32, #tpu.memory_space<vmem>>, vector<152x64xf32>
    %c0_1 = arith.constant 0 : index
    %c0_2 = arith.constant 0 : index
    %1 = vector.load %arg2[%c0_1, %c0_2] : memref<152x64xf32, #tpu.memory_space<vmem>>, vector<152x64xf32>
    %c0_3 = arith.constant 0 : index
    %c0_4 = arith.constant 0 : index
    %2 = vector.load %arg3[%c0_3, %c0_4] : memref<64x128xbf16, #tpu.memory_space<vmem>>, vector<64x128xbf16>
    %c0_5 = arith.constant 0 : index
    %c0_6 = arith.constant 0 : index
    %3 = vector.load %arg4[%c0_5, %c0_6] : memref<64x128xbf16, #tpu.memory_space<vmem>>, vector<64x128xbf16>
    %c0_7 = arith.constant 0 : index
    %c0_8 = arith.constant 0 : index
    %4 = vector.load %arg5[%c0_7, %c0_8] : memref<1x128xf32, #tpu.memory_space<vmem>>, vector<1x128xf32>
    %5 = tpu.concatenate %0, %1 in 0 : vector<152x64xf32>, vector<152x64xf32> -> vector<304x64xf32>
    %6 = tpu.concatenate %1, %0 in 0 : vector<152x64xf32>, vector<152x64xf32> -> vector<304x64xf32>
    %7 = arith.truncf %5 : vector<304x64xf32> to vector<304x64xbf16>
    %cst = arith.constant dense<0.000000e+00> : vector<304x128xf32>
    %8 = tpu.matmul %7, %2, %cst {dimension_numbers = #tpu.dot_dimension_numbers<[1], [0], [0], [1], [0, 0, 1, 1], [], []>} : vector<304x64xbf16>, vector<64x128xbf16>, vector<304x128xf32> -> vector<304x128xf32>
    %9 = arith.truncf %6 : vector<304x64xf32> to vector<304x64xbf16>
    %cst_9 = arith.constant dense<0.000000e+00> : vector<304x128xf32>
    %10 = tpu.matmul %9, %3, %cst_9 {dimension_numbers = #tpu.dot_dimension_numbers<[1], [0], [0], [1], [0, 0, 1, 1], [], []>} : vector<304x64xbf16>, vector<64x128xbf16>, vector<304x128xf32> -> vector<304x128xf32>
    %11 = arith.addf %8, %10 : vector<304x128xf32>
    %12 = vector.broadcast %4 : vector<1x128xf32> to vector<304x128xf32>
    %13 = arith.addf %11, %12 : vector<304x128xf32>
    %cst_10 = arith.constant 0.000000e+00 : f32
    %14 = vector.broadcast %cst_10 : f32 to vector<304x128xf32>
    %15 = arith.maximumf %13, %14 : vector<304x128xf32>
    %c0_11 = arith.constant 0 : index
    %c0_12 = arith.constant 0 : index
    %16 = vector.load %arg6[%c0_11, %c0_12] : memref<128x128xbf16, #tpu.memory_space<vmem>>, vector<128x128xbf16>
    %c0_13 = arith.constant 0 : index
    %c0_14 = arith.constant 0 : index
    %17 = vector.load %arg7[%c0_13, %c0_14] : memref<1x128xf32, #tpu.memory_space<vmem>>, vector<1x128xf32>
    %18 = arith.truncf %15 : vector<304x128xf32> to vector<304x128xbf16>
    %cst_15 = arith.constant dense<0.000000e+00> : vector<304x128xf32>
    %19 = tpu.matmul %18, %16, %cst_15 {dimension_numbers = #tpu.dot_dimension_numbers<[1], [0], [0], [1], [0, 0, 1, 1], [], []>} : vector<304x128xbf16>, vector<128x128xbf16>, vector<304x128xf32> -> vector<304x128xf32>
    %20 = vector.broadcast %17 : vector<1x128xf32> to vector<304x128xf32>
    %21 = arith.addf %19, %20 : vector<304x128xf32>
    %cst_16 = arith.constant 0.000000e+00 : f32
    %22 = vector.broadcast %cst_16 : f32 to vector<304x128xf32>
    %23 = arith.maximumf %21, %22 : vector<304x128xf32>
    %c0_17 = arith.constant 0 : index
    %c0_18 = arith.constant 0 : index
    %24 = vector.load %arg8[%c0_17, %c0_18] : memref<128x1xbf16, #tpu.memory_space<vmem>>, vector<128x1xbf16>
    %c0_19 = arith.constant 0 : index
    %c0_20 = arith.constant 0 : index
    %25 = vector.load %arg9[%c0_19, %c0_20] : memref<1x1xf32, #tpu.memory_space<vmem>>, vector<1x1xf32>
    %26 = vector.extract_strided_slice %23 {offsets = [0, 0], sizes = [152, 128], strides = [1, 1]} : vector<304x128xf32> to vector<152x128xf32>
    %27 = vector.extract_strided_slice %23 {offsets = [152, 0], sizes = [152, 128], strides = [1, 1]} : vector<304x128xf32> to vector<152x128xf32>
    %28 = arith.addf %26, %27 : vector<152x128xf32>
    %cst_21 = arith.constant 5.000000e-01 : f32
    %29 = vector.broadcast %cst_21 : f32 to vector<152x128xf32>
    %30 = arith.mulf %29, %28 : vector<152x128xf32>
    %31 = arith.truncf %30 : vector<152x128xf32> to vector<152x128xbf16>
    %cst_22 = arith.constant dense<0.000000e+00> : vector<152x1xf32>
    %32 = tpu.matmul %31, %24, %cst_22 {dimension_numbers = #tpu.dot_dimension_numbers<[1], [0], [0], [1], [0, 0, 1, 1], [], []>} : vector<152x128xbf16>, vector<128x1xbf16>, vector<152x1xf32> -> vector<152x1xf32>
    %33 = vector.broadcast %25 : vector<1x1xf32> to vector<152x1xf32>
    %34 = arith.addf %32, %33 : vector<152x1xf32>
    %c0_23 = arith.constant 0 : index
    %c0_24 = arith.constant 0 : index
    %35 = vector.load %arg10[%c0_23, %c0_24] : memref<152x1xf32, #tpu.memory_space<vmem>>, vector<152x1xf32>
    tpu.vector_store %arg10[%c0_23, %c0_24], %34 {strides = array<i32>} : memref<152x1xf32, #tpu.memory_space<vmem>>, vector<152x1xf32>,
    return
  }
  func.func @transform_0(%arg0: i32) -> (i32, i32) {
    %c0_i32 = arith.constant 0 : i32
    %c0_i32_0 = arith.constant 0 : i32
    return %arg0, %c0_i32 : i32, i32
  }
  func.func @transform_1(%arg0: i32) -> (i32, i32) {
    %c0_i32 = arith.constant 0 : i32
    %c0_i32_0 = arith.constant 0 : i32
    return %arg0, %c0_i32 : i32, i32
  }
  func.func @transform_2(%arg0: i32) -> (i32, i32) {
    %c0_i32 = arith.constant 0 : i32
    %c0_i32_0 = arith.constant 0 : i32
    %c0_i32_1 = arith.constant 0 : i32
    return %c0_i32, %c0_i32_0 : i32, i32
  }
  func.func @transform_3(%arg0: i32) -> (i32, i32) {
    %c0_i32 = arith.constant 0 : i32
    %c0_i32_0 = arith.constant 0 : i32
    %c0_i32_1 = arith.constant 0 : i32
    return %c0_i32, %c0_i32_0 : i32, i32
  }
  func.func @transform_4(%arg0: i32) -> (i32, i32) {
    %c0_i32 = arith.constant 0 : i32
    %c0_i32_0 = arith.constant 0 : i32
    %c0_i32_1 = arith.constant 0 : i32
    return %c0_i32, %c0_i32_0 : i32, i32
  }
  func.func @transform_5(%arg0: i32) -> (i32, i32) {
    %c0_i32 = arith.constant 0 : i32
    %c0_i32_0 = arith.constant 0 : i32
    %c0_i32_1 = arith.constant 0 : i32
    return %c0_i32, %c0_i32_0 : i32, i32
  }
  func.func @transform_6(%arg0: i32) -> (i32, i32) {
    %c0_i32 = arith.constant 0 : i32
    %c0_i32_0 = arith.constant 0 : i32
    %c0_i32_1 = arith.constant 0 : i32
    return %c0_i32, %c0_i32_0 : i32, i32
  }
  func.func @transform_7(%arg0: i32) -> (i32, i32) {
    %c0_i32 = arith.constant 0 : i32
    %c0_i32_0 = arith.constant 0 : i32
    %c0_i32_1 = arith.constant 0 : i32
    return %c0_i32, %c0_i32_0 : i32, i32
  }
  func.func @transform_8(%arg0: i32) -> (i32, i32) {
    %c0_i32 = arith.constant 0 : i32
    %c0_i32_0 = arith.constant 0 : i32
    %c0_i32_1 = arith.constant 0 : i32
    return %c0_i32, %c0_i32_0 : i32, i32
  }
  func.func @transform_9(%arg0: i32) -> (i32, i32) {
    %c0_i32 = arith.constant 0 : i32
    %c0_i32_0 = arith.constant 0 : i32
    return %arg0, %c0_i32 : i32, i32
  }
}

</mosaic_0001>

<llo_original>
// kernel: tpu_custom_call.1
$region0: #{tpu_custom_call.1}
  #allocation0 [shape = 'u32[]', space=smem, size = 0x4, offset = 0x4, fixed_abs, tag = 'smem constant byte address 0x4 - core index']
  #allocation1 [shape = 'u32[144,128]{1,0:T(1,128)}', space=vmem, size = 0x12000, scoped, tag = 'internal scratch']
  #allocation2 [shape = 'f32[1,1]{1,0:T(1,128)S(1)}', space=vmem, size = 0x200, scoped, tag = 'scoped memory for tpu_custom_call.1']
  %s0 = inlined_call_operand.vmem [shape: f32[304,64], index: 0, kind: input, shape index: {}]
  %s1 = inlined_call_operand.vmem [shape: f32[304,64], index: 1, kind: input, shape index: {}]
  %s2 = inlined_call_operand.vmem [shape: bf16[64,128], index: 2, kind: input, shape index: {}]
  %s3 = inlined_call_operand.vmem [shape: bf16[64,128], index: 3, kind: input, shape index: {}]
  %s4 = inlined_call_operand.vmem [shape: f32[1,128], index: 4, kind: input, shape index: {}]
  %s5 = inlined_call_operand.vmem [shape: bf16[128,128], index: 5, kind: input, shape index: {}]
  %s6 = inlined_call_operand.vmem [shape: f32[1,128], index: 6, kind: input, shape index: {}]
  %s7 = inlined_call_operand.vmem [shape: bf16[128,1], index: 7, kind: input, shape index: {}]
  %s8 = inlined_call_operand.<no memory space> [shape: f32[1,1], index: 8, kind: input, shape index: {}]
  %s9 = inlined_call_operand.vmem [shape: f32[304,1], index: 9, kind: output, shape index: {}]
  %s10 = sld [smem:[#allocation0]]
  $region69: #{tpu_custom_call.1} parent=0
    _
  %s12 = ssub.s32 1, %s10
  %s13 = scalar_select 0, %s12, %s10
  %v14 = vstv %s8
  %15 = vst [vmem:[#allocation2] sm:$0x1] %v14
  loop: start=0, step=1, limit=4
  $region2: #{tpu_custom_call.1} parent=0 // loop_pre_header
    _
  $region3: #{tpu_custom_call.1} parent=0 // loop_header
    %s17 = sphi 0, %s21
    %p18 = scmp.ge.s32.totalorder %s17, 4
    %s27 = sphi 0, %s29
    %s30 = sphi 0, %s27
    %s31 = sphi 0, %s30
    %s47 = sphi 0, %s31
    %s53 = sphi 0, %s55
    %s56 = sphi 0, %s53
    %s57 = sphi 0, %s56
    %s73 = sphi 0, %s57
    %s77 = sphi 0, %s77
    %s79 = sphi 0, %s77
    %s80 = sphi 0, %s79
    %s94 = sphi 0, %s80
    %s98 = sphi 0, %s98
    %s100 = sphi 0, %s98
    %s101 = sphi 0, %s100
    %s115 = sphi 0, %s101
    %s119 = sphi 0, %s119
    %s121 = sphi 0, %s119
    %s122 = sphi 0, %s121
    %s136 = sphi 0, %s122
    %s140 = sphi 0, %s140
    %s142 = sphi 0, %s140
    %s143 = sphi 0, %s142
    %s157 = sphi 0, %s143
    %s161 = sphi 0, %s161
    %s163 = sphi 0, %s161
    %s164 = sphi 0, %s163
    %s178 = sphi 0, %s164
    %s182 = sphi 0, %s182
    %s184 = sphi 0, %s182
    %s185 = sphi 0, %s184
    %s199 = sphi 0, %s185
    %s203 = sphi 0, %s203
    %s205 = sphi 0, %s203
    %s206 = sphi 0, %s205
    %s220 = sphi 0, %s206
    %s226 = sphi 0, %s228
    %s229 = sphi 0, %s226
    %s230 = sphi 0, %s229
    %s246 = sphi 0, %s230
  $region4: #{tpu_custom_call.1} parent=0 // loop_header_branch
    %20 = sbr.rel (%p18) target = $region8
  $region5: #{tpu_custom_call.1} parent=0 // loop_body
    %s22 = ssub.s32 %s17, 1
    %s23 = ssub.s32 %s17, 2
    %s24 = sadd.s32 %s17, 1
    %s25 = ssub.s32 %s17, %s24
    %p26 = scmp.eq.s32.totalorder %s25, 0
    %s28 = sadd.s32 %s27, 1
    %s29 = scalar_select %p26, %s27, %s28
    %p32 = pneg %p26
    %p33 = scmp.eq.s32.totalorder %s17, 1
    %p34 = por %p32, %p33
    %p35 = scmp.ne.s32.totalorder %s27, %s30
    %p36 = scmp.eq.s32.totalorder %s17, 0
    %p37 = por %p35, %p36
    %p38 = scmp.ne.s32.totalorder %s27, %s30
    %p39 = scmp.eq.s32.totalorder %s22, 1
    %p40 = por %p38, %p39
    %p41 = scmp.ne.s32.totalorder %s30, %s31
    %p42 = scmp.eq.s32.totalorder %s22, 0
    %p43 = por %p41, %p42
    %p44 = scmp.ne.s32.totalorder %s30, %s31
    %p45 = scmp.eq.s32.totalorder %s23, 1
    %p46 = por %p44, %p45
    %p48 = scmp.ne.s32.totalorder %s31, %s47
    %p49 = scmp.eq.s32.totalorder %s23, 0
    %p50 = por %p48, %p49
    %s51 = ssub.s32 %s17, %s24
    %p52 = scmp.eq.s32.totalorder %s51, 0
    %s54 = sadd.s32 %s53, 1
    %s55 = scalar_select %p52, %s53, %s54
    %p58 = pneg %p52
    %p59 = scmp.eq.s32.totalorder %s17, 1
    %p60 = por %p58, %p59
    %p61 = scmp.ne.s32.totalorder %s53, %s56
    %p62 = scmp.eq.s32.totalorder %s17, 0
    %p63 = por %p61, %p62
    %p64 = scmp.ne.s32.totalorder %s53, %s56
    %p65 = scmp.eq.s32.totalorder %s22, 1
    %p66 = por %p64, %p65
    %p67 = scmp.ne.s32.totalorder %s56, %s57
    %p68 = scmp.eq.s32.totalorder %s22, 0
    %p69 = por %p67, %p68
    %p70 = scmp.ne.s32.totalorder %s56, %s57
    %p71 = scmp.eq.s32.totalorder %s23, 1
    %p72 = por %p70, %p71
    %p74 = scmp.ne.s32.totalorder %s57, %s73
    %p75 = scmp.eq.s32.totalorder %s23, 0
    %p76 = por %p74, %p75
    %s78 = sadd.s32 %s77, 1
    %p81 = scmp.eq.s32.totalorder %s17, 1
    %p82 = scmp.ne.s32.totalorder %s77, %s79
    %p83 = scmp.eq.s32.totalorder %s17, 0
    %p84 = por %p82, %p83
    %p85 = scmp.ne.s32.totalorder %s77, %s79
    %p86 = scmp.eq.s32.totalorder %s22, 1
    %p87 = por %p85, %p86
    %p88 = scmp.ne.s32.totalorder %s79, %s80
    %p89 = scmp.eq.s32.totalorder %s22, 0
    %p90 = por %p88, %p89
    %p91 = scmp.ne.s32.totalorder %s79, %s80
    %p92 = scmp.eq.s32.totalorder %s23, 1
    %p93 = por %p91, %p92
    %p95 = scmp.ne.s32.totalorder %s80, %s94
    %p96 = scmp.eq.s32.totalorder %s23, 0
    %p97 = por %p95, %p96
    %s99 = sadd.s32 %s98, 1
    %p102 = scmp.eq.s32.totalorder %s17, 1
    %p103 = scmp.ne.s32.totalorder %s98, %s100
    %p104 = scmp.eq.s32.totalorder %s17, 0
    %p105 = por %p103, %p104
    %p106 = scmp.ne.s32.totalorder %s98, %s100
    %p107 = scmp.eq.s32.totalorder %s22, 1
    %p108 = por %p106, %p107
    %p109 = scmp.ne.s32.totalorder %s100, %s101
    %p110 = scmp.eq.s32.totalorder %s22, 0
    %p111 = por %p109, %p110
    %p112 = scmp.ne.s32.totalorder %s100, %s101
    %p113 = scmp.eq.s32.totalorder %s23, 1
    %p114 = por %p112, %p113
    %p116 = scmp.ne.s32.totalorder %s101, %s115
    %p117 = scmp.eq.s32.totalorder %s23, 0
    %p118 = por %p116, %p117
    %s120 = sadd.s32 %s119, 1
    %p123 = scmp.eq.s32.totalorder %s17, 1
    %p124 = scmp.ne.s32.totalorder %s119, %s121
    %p125 = scmp.eq.s32.totalorder %s17, 0
    %p126 = por %p124, %p125
    %p127 = scmp.ne.s32.totalorder %s119, %s121
    %p128 = scmp.eq.s32.totalorder %s22, 1
    %p129 = por %p127, %p128
    %p130 = scmp.ne.s32.totalorder %s121, %s122
    %p131 = scmp.eq.s32.totalorder %s22, 0
    %p132 = por %p130, %p131
    %p133 = scmp.ne.s32.totalorder %s121, %s122
    %p134 = scmp.eq.s32.totalorder %s23, 1
    %p135 = por %p133, %p134
    %p137 = scmp.ne.s32.totalorder %s122, %s136
    %p138 = scmp.eq.s32.totalorder %s23, 0
    %p139 = por %p137, %p138
    %s141 = sadd.s32 %s140, 1
    %p144 = scmp.eq.s32.totalorder %s17, 1
    %p145 = scmp.ne.s32.totalorder %s140, %s142
    %p146 = scmp.eq.s32.totalorder %s17, 0
    %p147 = por %p145, %p146
    %p148 = scmp.ne.s32.totalorder %s140, %s142
    %p149 = scmp.eq.s32.totalorder %s22, 1
    %p150 = por %p148, %p149
    %p151 = scmp.ne.s32.totalorder %s142, %s143
    %p152 = scmp.eq.s32.totalorder %s22, 0
    %p153 = por %p151, %p152
    %p154 = scmp.ne.s32.totalorder %s142, %s143
    %p155 = scmp.eq.s32.totalorder %s23, 1
    %p156 = por %p154, %p155
    %p158 = scmp.ne.s32.totalorder %s143, %s157
    %p159 = scmp.eq.s32.totalorder %s23, 0
    %p160 = por %p158, %p159
    %s162 = sadd.s32 %s161, 1
    %p165 = scmp.eq.s32.totalorder %s17, 1
    %p166 = scmp.ne.s32.totalorder %s161, %s163
    %p167 = scmp.eq.s32.totalorder %s17, 0
    %p168 = por %p166, %p167
    %p169 = scmp.ne.s32.totalorder %s161, %s163
    %p170 = scmp.eq.s32.totalorder %s22, 1
    %p171 = por %p169, %p170
    %p172 = scmp.ne.s32.totalorder %s163, %s164
    %p173 = scmp.eq.s32.totalorder %s22, 0
    %p174 = por %p172, %p173
    %p175 = scmp.ne.s32.totalorder %s163, %s164
    %p176 = scmp.eq.s32.totalorder %s23, 1
    %p177 = por %p175, %p176
    %p179 = scmp.ne.s32.totalorder %s164, %s178
    %p180 = scmp.eq.s32.totalorder %s23, 0
    %p181 = por %p179, %p180
    %s183 = sadd.s32 %s182, 1
    %p186 = scmp.eq.s32.totalorder %s17, 1
    %p187 = scmp.ne.s32.totalorder %s182, %s184
    %p188 = scmp.eq.s32.totalorder %s17, 0
    %p189 = por %p187, %p188
    %p190 = scmp.ne.s32.totalorder %s182, %s184
    %p191 = scmp.eq.s32.totalorder %s22, 1
    %p192 = por %p190, %p191
    %p193 = scmp.ne.s32.totalorder %s184, %s185
    %p194 = scmp.eq.s32.totalorder %s22, 0
    %p195 = por %p193, %p194
    %p196 = scmp.ne.s32.totalorder %s184, %s185
    %p197 = scmp.eq.s32.totalorder %s23, 1
    %p198 = por %p196, %p197
    %p200 = scmp.ne.s32.totalorder %s185, %s199
    %p201 = scmp.eq.s32.totalorder %s23, 0
    %p202 = por %p200, %p201
    %s204 = sadd.s32 %s203, 1
    %p207 = scmp.eq.s32.totalorder %s17, 1
    %p208 = scmp.ne.s32.totalorder %s203, %s205
    %p209 = scmp.eq.s32.totalorder %s17, 0
    %p210 = por %p208, %p209
    %p211 = scmp.ne.s32.totalorder %s203, %s205
    %p212 = scmp.eq.s32.totalorder %s22, 1
    %p213 = por %p211, %p212
    %p214 = scmp.ne.s32.totalorder %s205, %s206
    %p215 = scmp.eq.s32.totalorder %s22, 0
    %p216 = por %p214, %p215
    %p217 = scmp.ne.s32.totalorder %s205, %s206
    %p218 = scmp.eq.s32.totalorder %s23, 1
    %p219 = por %p217, %p218
    %p221 = scmp.ne.s32.totalorder %s206, %s220
    %p222 = scmp.eq.s32.totalorder %s23, 0
    %p223 = por %p221, %p222
    %s224 = ssub.s32 %s17, %s24
    %p225 = scmp.eq.s32.totalorder %s224, 0
    %s227 = sadd.s32 %s226, 1
    %s228 = scalar_select %p225, %s226, %s227
    %p231 = pneg %p225
    %p232 = scmp.eq.s32.totalorder %s17, 1
    %p233 = por %p231, %p232
    %p234 = scmp.ne.s32.totalorder %s226, %s229
    %p235 = scmp.eq.s32.totalorder %s17, 0
    %p236 = por %p234, %p235
    %p237 = scmp.ne.s32.totalorder %s226, %s229
    %p238 = scmp.eq.s32.totalorder %s22, 1
    %p239 = por %p237, %p238
    %p240 = scmp.ne.s32.totalorder %s229, %s230
    %p241 = scmp.eq.s32.totalorder %s22, 0
    %p242 = por %p240, %p241
    %p243 = scmp.ne.s32.totalorder %s229, %s230
    %p244 = scmp.eq.s32.totalorder %s23, 1
    %p245 = por %p243, %p244
    %p247 = scmp.ne.s32.totalorder %s230, %s246
    %p248 = scmp.eq.s32.totalorder %s23, 0
    %p249 = por %p247, %p248
    %p250 = scmp.le.s32.totalorder 1, %s17
    %p251 = scmp.lt.s32.totalorder %s17, 3
    %p252 = pnand %p250, %p251
    %p253 = pneg %p252
    // Predicated region
    $region9: #{tpu_custom_call.1} parent=5 // pred_check
      _
    $region10: #{tpu_custom_call.1} parent=5 // pred_check_branch
      %255 = sbr.rel (%p252) target = $region12
    $region11: #{tpu_custom_call.1} parent=5 // pred_region
      %s256 = ssub.s32 %s17, 1
      // Predicated region
      $region13: #{tpu_custom_call.1} parent=11 // pred_check
        %p257 = pneg %p90
      $region14: #{tpu_custom_call.1} parent=11 // pred_check_branch
        %259 = sbr.rel (%p257) target = $region16
      $region15: #{tpu_custom_call.1} parent=11 // pred_region
        _
      $region16: #{tpu_custom_call.1} parent=11 // pred_fallthru
        _
      // Predicated region
      $region17: #{tpu_custom_call.1} parent=11 // pred_check
        %p260 = pneg %p111
      $region18: #{tpu_custom_call.1} parent=11 // pred_check_branch
        %262 = sbr.rel (%p260) target = $region20
      $region19: #{tpu_custom_call.1} parent=11 // pred_region
        _
      $region20: #{tpu_custom_call.1} parent=11 // pred_fallthru
        _
      // Predicated region
      $region21: #{tpu_custom_call.1} parent=11 // pred_check
        %p263 = pneg %p132
      $region22: #{tpu_custom_call.1} parent=11 // pred_check_branch
        %265 = sbr.rel (%p263) target = $region24
      $region23: #{tpu_custom_call.1} parent=11 // pred_region
        _
      $region24: #{tpu_custom_call.1} parent=11 // pred_fallthru
        _
      // Predicated region
      $region25: #{tpu_custom_call.1} parent=11 // pred_check
        %p266 = pneg %p153
      $region26: #{tpu_custom_call.1} parent=11 // pred_check_branch
        %268 = sbr.rel (%p266) target = $region28
      $region27: #{tpu_custom_call.1} parent=11 // pred_region
        _
      $region28: #{tpu_custom_call.1} parent=11 // pred_fallthru
        _
      // Predicated region
      $region29: #{tpu_custom_call.1} parent=11 // pred_check
        %p269 = pneg %p174
      $region30: #{tpu_custom_call.1} parent=11 // pred_check_branch
        %271 = sbr.rel (%p269) target = $region32
      $region31: #{tpu_custom_call.1} parent=11 // pred_region
        _
      $region32: #{tpu_custom_call.1} parent=11 // pred_fallthru
        _
      // Predicated region
      $region33: #{tpu_custom_call.1} parent=11 // pred_check
        %p272 = pneg %p195
      $region34: #{tpu_custom_call.1} parent=11 // pred_check_branch
        %274 = sbr.rel (%p272) target = $region36
      $region35: #{tpu_custom_call.1} parent=11 // pred_region
        _
      $region36: #{tpu_custom_call.1} parent=11 // pred_fallthru
        _
      // Predicated region
      $region37: #{tpu_custom_call.1} parent=11 // pred_check
        %p275 = pneg %p216
      $region38: #{tpu_custom_call.1} parent=11 // pred_check_branch
        %277 = sbr.rel (%p275) target = $region40
      $region39: #{tpu_custom_call.1} parent=11 // pred_region
        _
      $region40: #{tpu_custom_call.1} parent=11 // pred_fallthru
        _
    $region12: #{tpu_custom_call.1} parent=5 // pred_fallthru
      _
    %p278 = scmp.lt.s32.totalorder %s17, 2
    // Predicated region
    $region41: #{tpu_custom_call.1} parent=5 // pred_check
      %p279 = pneg %p278
    $region42: #{tpu_custom_call.1} parent=5 // pred_check_branch
      %281 = sbr.rel (%p279) target = $region44
    $region43: #{tpu_custom_call.1} parent=5 // pred_region
      // Predicated region
      $region45: #{tpu_custom_call.1} parent=43 // pred_check
        %p282 = pneg %p37
      $region46: #{tpu_custom_call.1} parent=43 // pred_check_branch
        %284 = sbr.rel (%p282) target = $region48
      $region47: #{tpu_custom_call.1} parent=43 // pred_region
        %s285 = smul.u32 19, %s17
        %p286 = scmp.lt.s32.totalorder %s285, 37
        %s287 = scalar_select %p286, %s285, 37
        %s288 = smul.addr %s287, 8
        %s289 = scalar_lea.vmem %s0, %s288
        %s290 = smul.u32 19, %s17
      $region48: #{tpu_custom_call.1} parent=43 // pred_fallthru
        _
      // Predicated region
      $region49: #{tpu_custom_call.1} parent=43 // pred_check
        %p291 = pneg %p63
      $region50: #{tpu_custom_call.1} parent=43 // pred_check_branch
        %293 = sbr.rel (%p291) target = $region52
      $region51: #{tpu_custom_call.1} parent=43 // pred_region
        %s294 = smul.u32 19, %s17
        %p295 = scmp.lt.s32.totalorder %s294, 37
        %s296 = scalar_select %p295, %s294, 37
        %s297 = smul.addr %s296, 8
        %s298 = scalar_lea.vmem %s1, %s297
        %s299 = smul.u32 19, %s17
      $region52: #{tpu_custom_call.1} parent=43 // pred_fallthru
        _
    $region44: #{tpu_custom_call.1} parent=5 // pred_fallthru
      _
    %p300 = scmp.le.s32.totalorder 1, %s17
    %p301 = scmp.lt.s32.totalorder %s17, 3
    %p302 = pnand %p300, %p301
    %p303 = pneg %p302
    // Predicated region
    $region53: #{tpu_custom_call.1} parent=5 // pred_check
      _
    $region54: #{tpu_custom_call.1} parent=5 // pred_check_branch
      %305 = sbr.rel (%p302) target = $region56
    $region55: #{tpu_custom_call.1} parent=5 // pred_region
      %s306 = ssub.s32 %s17, 1
      %s307 = smul.u32 19, %s22
      %p308 = scmp.lt.s32.totalorder %s307, 37
      %s309 = scalar_select %p308, %s307, 37
      %s310 = smul.addr %s309, 8
      %s311 = scalar_lea.vmem %s0, %s310
      %p312 = pneg %p43
      %p313 = pneg %p40
      %s314 = smul.u32 19, %s22
      %p315 = scmp.lt.s32.totalorder %s314, 37
      %s316 = scalar_select %p315, %s314, 37
      %s317 = smul.addr %s316, 8
      %s318 = scalar_lea.vmem %s1, %s317
      %p319 = pneg %p69
      %p320 = pneg %p66
      %p321 = pneg %p90
      %p322 = pneg %p87
      %p323 = pneg %p111
      %p324 = pneg %p108
      %p325 = pneg %p132
      %p326 = pneg %p129
      %p327 = pneg %p153
      %p328 = pneg %p150
      %p329 = pneg %p174
      %p330 = pneg %p171
      %p331 = pneg %p195
      %p332 = pneg %p192
      %p333 = pneg %p216
      %p334 = pneg %p213
      %p335 = pneg %p242
      %p336 = pneg %p239
      %s337 = smul.u32 19, %s22
      %p338 = scmp.lt.s32.totalorder %s337, 37
      %s339 = scalar_select %p338, %s337, 37
      %s340 = smul.addr %s339, 8
      %s341 = scalar_lea.vmem %s9, %s340
      %s342 = smul.u32 19, %s22
      %p343 = scmp.lt.s32.totalorder %s342, 37
      %s344 = scalar_select %p343, %s342, 37
      %s345 = smul.addr %s344, 8
      %s346 = scalar_lea.vmem %s0, %s345
      %s347 = smul.u32 19, %s22
      %s348 = smul.u32 19, %s22
      %p349 = scmp.lt.s32.totalorder %s348, 37
      %s350 = scalar_select %p349, %s348, 37
      %s351 = smul.addr %s350, 8
      %s352 = scalar_lea.vmem %s1, %s351
      %s353 = smul.u32 19, %s22
      %s354 = smul.u32 19, %s22
      %p355 = scmp.lt.s32.totalorder %s354, 37
      %s356 = scalar_select %p355, %s354, 37
      %s357 = smul.addr %s356, 8
      %s358 = scalar_lea.vmem %s9, %s357
      %s359 = smul.u32 19, %s22
      %v361 = vld [vmem:[%s346] sm:$0xff]
      %v362 = vld [vmem:[%s346 + $0x8] sm:$0xff]
      %v363 = vld [vmem:[%s346 + $0x10] sm:$0xff]
      %v364 = vld [vmem:[%s346 + $0x18] sm:$0xff]
      %v365 = vld [vmem:[%s346 + $0x20] sm:$0xff]
      %v366 = vld [vmem:[%s346 + $0x28] sm:$0xff]
      %v367 = vld [vmem:[%s346 + $0x30] sm:$0xff]
      %v368 = vld [vmem:[%s346 + $0x38] sm:$0xff]
      %v369 = vld [vmem:[%s346 + $0x40] sm:$0xff]
      %v370 = vld [vmem:[%s346 + $0x48] sm:$0xff]
      %v371 = vld [vmem:[%s346 + $0x50] sm:$0xff]
      %v372 = vld [vmem:[%s346 + $0x58] sm:$0xff]
      %v373 = vld [vmem:[%s346 + $0x60] sm:$0xff]
      %v374 = vld [vmem:[%s346 + $0x68] sm:$0xff]
      %v375 = vld [vmem:[%s346 + $0x70] sm:$0xff]
      %v376 = vld [vmem:[%s346 + $0x78] sm:$0xff]
      %v377 = vld [vmem:[%s346 + $0x80] sm:$0xff]
      %v378 = vld [vmem:[%s346 + $0x88] sm:$0xff]
      %v379 = vld [vmem:[%s346 + $0x90] sm:$0xff]
      %v380 = vld [vmem:[%s352] sm:$0xff]
      %v381 = vld [vmem:[%s352 + $0x8] sm:$0xff]
      %v382 = vld [vmem:[%s352 + $0x10] sm:$0xff]
      %v383 = vld [vmem:[%s352 + $0x18] sm:$0xff]
      %v384 = vld [vmem:[%s352 + $0x20] sm:$0xff]
      %v385 = vld [vmem:[%s352 + $0x28] sm:$0xff]
      %v386 = vld [vmem:[%s352 + $0x30] sm:$0xff]
      %v387 = vld [vmem:[%s352 + $0x38] sm:$0xff]
      %v388 = vld [vmem:[%s352 + $0x40] sm:$0xff]
      %v389 = vld [vmem:[%s352 + $0x48] sm:$0xff]
      %v390 = vld [vmem:[%s352 + $0x50] sm:$0xff]
      %v391 = vld [vmem:[%s352 + $0x58] sm:$0xff]
      %v392 = vld [vmem:[%s352 + $0x60] sm:$0xff]
      %v393 = vld [vmem:[%s352 + $0x68] sm:$0xff]
      %v394 = vld [vmem:[%s352 + $0x70] sm:$0xff]
      %v395 = vld [vmem:[%s352 + $0x78] sm:$0xff]
      %v396 = vld [vmem:[%s352 + $0x80] sm:$0xff]
      %v397 = vld [vmem:[%s352 + $0x88] sm:$0xff]
      %v398 = vld [vmem:[%s352 + $0x90] sm:$0xff]
      %v399 = vld [vmem:[%s2] sm:$0xf]
      %v400 = vld [vmem:[%s2 + $0x4] sm:$0xf]
      %v401 = vld [vmem:[%s2 + $0x8] sm:$0xf]
      %v402 = vld [vmem:[%s2 + $0xc] sm:$0xf]
      %v403 = vld [vmem:[%s2 + $0x10] sm:$0xf]
      %v404 = vld [vmem:[%s2 + $0x14] sm:$0xf]
      %v405 = vld [vmem:[%s2 + $0x18] sm:$0xf]
      %v406 = vld [vmem:[%s2 + $0x1c] sm:$0xf]
      %v407 = vld [vmem:[%s3] sm:$0xf]
      %v408 = vld [vmem:[%s3 + $0x4] sm:$0xf]
      %v409 = vld [vmem:[%s3 + $0x8] sm:$0xf]
      %v410 = vld [vmem:[%s3 + $0xc] sm:$0xf]
      %v411 = vld [vmem:[%s3 + $0x10] sm:$0xf]
      %v412 = vld [vmem:[%s3 + $0x14] sm:$0xf]
      %v413 = vld [vmem:[%s3 + $0x18] sm:$0xf]
      %v414 = vld [vmem:[%s3 + $0x1c] sm:$0xf]
      %v415 = vld [vmem:[%s4] sm:$0x1]
      %v416 = vpack.c.bf16 %v362, %v361
      %v417 = vpack.c.bf16 %v364, %v363
      %v418 = vpack.c.bf16 %v366, %v365
      %v419 = vpack.c.bf16 %v368, %v367
      %v420 = vpack.c.bf16 %v370, %v369
      %v421 = vpack.c.bf16 %v372, %v371
      %v422 = vpack.c.bf16 %v374, %v373
      %v423 = vpack.c.bf16 %v376, %v375
      %v424 = vpack.c.bf16 %v378, %v377
      %v425 = vpack.c.bf16 %v380, %v379
      %v426 = vpack.c.bf16 %v382, %v381
      %v427 = vpack.c.bf16 %v384, %v383
      %v428 = vpack.c.bf16 %v386, %v385
      %v429 = vpack.c.bf16 %v388, %v387
      %v430 = vpack.c.bf16 %v390, %v389
      %v431 = vpack.c.bf16 %v392, %v391
      %v432 = vpack.c.bf16 %v394, %v393
      %v433 = vpack.c.bf16 %v396, %v395
      %v434 = vpack.c.bf16 %v398, %v397
      %v435 = vpack.c.bf16 %v381, %v380
      %v436 = vpack.c.bf16 %v383, %v382
      %v437 = vpack.c.bf16 %v385, %v384
      %v438 = vpack.c.bf16 %v387, %v386
      %v439 = vpack.c.bf16 %v389, %v388
      %v440 = vpack.c.bf16 %v391, %v390
      %v441 = vpack.c.bf16 %v393, %v392
      %v442 = vpack.c.bf16 %v395, %v394
      %v443 = vpack.c.bf16 %v397, %v396
      %v444 = vpack.c.bf16 %v361, %v398
      %v445 = vpack.c.bf16 %v363, %v362
      %v446 = vpack.c.bf16 %v365, %v364
      %v447 = vpack.c.bf16 %v367, %v366
      %v448 = vpack.c.bf16 %v369, %v368
      %v449 = vpack.c.bf16 %v371, %v370
      %v450 = vpack.c.bf16 %v373, %v372
      %v451 = vpack.c.bf16 %v375, %v374
      %v452 = vpack.c.bf16 %v377, %v376
      %v453 = vpack.c.bf16 %v379, %v378
      %v462 = vunpack.c.l.b16 %v407
      %v463 = vunpack.c.l.b16 %v408
      %v464 = vunpack.c.l.b16 %v409
      %v465 = vunpack.c.l.b16 %v410
      %v466 = vunpack.c.l.b16 %v411
      %v467 = vunpack.c.l.b16 %v412
      %v468 = vunpack.c.l.b16 %v413
      %v469 = vunpack.c.l.b16 %v414
      %v470 = vpack.c.b16 %v463, %v462
      %v471 = vpack.c.b16 %v465, %v464
      %v472 = vpack.c.b16 %v467, %v466
      %v473 = vpack.c.b16 %v469, %v468
      %vm478 = vcmask 523264
      %v480 = vsel %vm478, %v435, 0
      %v483 = vsel %vm478, %v436, 0
      %v486 = vsel %vm478, %v437, 0
      %v489 = vsel %vm478, %v438, 0
      %v492 = vsel %vm478, %v439, 0
      %v495 = vsel %vm478, %v440, 0
      %v498 = vsel %vm478, %v441, 0
      %v501 = vsel %vm478, %v442, 0
      %v504 = vsel %vm478, %v443, 0
      %v507 = vsel %vm478, %v444, 0
      %v510 = vsel %vm478, %v445, 0
      %v513 = vsel %vm478, %v446, 0
      %v516 = vsel %vm478, %v447, 0
      %v519 = vsel %vm478, %v448, 0
      %v522 = vsel %vm478, %v449, 0
      %v525 = vsel %vm478, %v450, 0
      %v528 = vsel %vm478, %v451, 0
      %v531 = vsel %vm478, %v452, 0
      %v534 = vsel %vm478, %v453, 0
      %536 = vmatprep.subr.bf16.mxu0 0
      %537 = vmatpush1.bf16.msra.mxu0 %v470
      %538 = vmatprep.subr.bf16.mxu0 0
      %539 = vmatpush1.bf16.msra.mxu0 %v471
      %540 = vmatprep.subr.bf16.mxu0 0
      %541 = vmatpush1.bf16.msra.mxu0 %v472
      %542 = vmatprep.subr.bf16.mxu0 0
      %543 = vmatpush1.bf16.msra.mxu0 %v473
      %544 = vmatprep.subr.bf16.mxu0 0
      %545 = vmatpush1.bf16.msra.mxu0 0
      %546 = vmatprep.subr.bf16.mxu0 0
      %547 = vmatpush1.bf16.msra.mxu0 0
      %548 = vmatprep.subr.bf16.mxu0 0
      %549 = vmatpush1.bf16.msra.mxu0 0
      %550 = vmatprep.subr.bf16.mxu0 0
      %551 = vmatpush1.bf16.msra.mxu0 0
      %552 = vmatprep.subr.bf16.mxu0 0
      %553 = vmatpush1.bf16.msra.mxu0 0
      %554 = vmatprep.subr.bf16.mxu0 0
      %555 = vmatpush1.bf16.msra.mxu0 0
      %556 = vmatprep.subr.bf16.mxu0 0
      %557 = vmatpush1.bf16.msra.mxu0 0
      %558 = vmatprep.subr.bf16.mxu0 0
      %559 = vmatpush1.bf16.msra.mxu0 0
      %560 = vmatprep.subr.bf16.mxu0 0
      %561 = vmatpush1.bf16.msra.mxu0 0
      %562 = vmatprep.subr.bf16.mxu0 0
      %563 = vmatpush1.bf16.msra.mxu0 0
      %564 = vmatprep.subr.bf16.mxu0 0
      %565 = vmatpush1.bf16.msra.mxu0 0
      %566 = vmatprep.subr.bf16.mxu0 0
      %567 = vmatpush1.bf16.msra.mxu0 0
      %568 = vmatprep.mubr.bf16.mxu0 0
      %569 = vmatmul.mubr.bf16.gmra.mrb[0].mxu0 %v480
      %v570 = vpop.f32.mrb[0].mxu0
      %v571 = vadd.f32 0.0, %v570
      %v572 = vpop.f32.mrb[0].mxu0
      %v573 = vpop.f32.mrb[0].mxu0
      %v574 = vadd.f32 0.0, %v573
      %v575 = vpop.f32.mrb[0].mxu0
      %576 = vmatprep.mubr.bf16.mxu0 0
      %577 = vmatmul.mubr.bf16.gmra.mrb[0].mxu0 %v483
      %v578 = vpop.f32.mrb[0].mxu0
      %v579 = vadd.f32 0.0, %v578
      %v580 = vpop.f32.mrb[0].mxu0
      %v581 = vpop.f32.mrb[0].mxu0
      %v582 = vadd.f32 0.0, %v581
      %v583 = vpop.f32.mrb[0].mxu0
      %584 = vmatprep.mubr.bf16.mxu0 0
      %585 = vmatmul.mubr.bf16.gmra.mrb[0].mxu0 %v486
      %v586 = vpop.f32.mrb[0].mxu0
      %v587 = vadd.f32 0.0, %v586
      %v588 = vpop.f32.mrb[0].mxu0
      %v589 = vpop.f32.mrb[0].mxu0
      %v590 = vadd.f32 0.0, %v589
      %v591 = vpop.f32.mrb[0].mxu0
      %592 = vmatprep.mubr.bf16.mxu0 0
      %593 = vmatmul.mubr.bf16.gmra.mrb[0].mxu0 %v489
      %v594 = vpop.f32.mrb[0].mxu0
      %v595 = vadd.f32 0.0, %v594
      %v596 = vpop.f32.mrb[0].mxu0
      %v597 = vpop.f32.mrb[0].mxu0
      %v598 = vadd.f32 0.0, %v597
      %v599 = vpop.f32.mrb[0].mxu0
      %600 = vmatprep.mubr.bf16.mxu0 0
      %601 = vmatmul.mubr.bf16.gmra.mrb[0].mxu0 %v492
      %v602 = vpop.f32.mrb[0].mxu0
      %v603 = vadd.f32 0.0, %v602
      %v604 = vpop.f32.mrb[0].mxu0
      %v605 = vpop.f32.mrb[0].mxu0
      %v606 = vadd.f32 0.0, %v605
      %v607 = vpop.f32.mrb[0].mxu0
      %608 = vmatprep.mubr.bf16.mxu0 0
      %609 = vmatmul.mubr.bf16.gmra.mrb[0].mxu0 %v495
      %v610 = vpop.f32.mrb[0].mxu0
      %v611 = vadd.f32 0.0, %v610
      %v612 = vpop.f32.mrb[0].mxu0
      %v613 = vpop.f32.mrb[0].mxu0
      %v614 = vadd.f32 0.0, %v613
      %v615 = vpop.f32.mrb[0].mxu0
      %616 = vmatprep.mubr.bf16.mxu0 0
      %617 = vmatmul.mubr.bf16.gmra.mrb[0].mxu0 %v498
      %v618 = vpop.f32.mrb[0].mxu0
      %v619 = vadd.f32 0.0, %v618
      %v620 = vpop.f32.mrb[0].mxu0
      %v621 = vpop.f32.mrb[0].mxu0
      %v622 = vadd.f32 0.0, %v621
      %v623 = vpop.f32.mrb[0].mxu0
      %624 = vmatprep.mubr.bf16.mxu0 0
      %625 = vmatmul.mubr.bf16.gmra.mrb[0].mxu0 %v501
      %v626 = vpop.f32.mrb[0].mxu0
      %v627 = vadd.f32 0.0, %v626
      %v628 = vpop.f32.mrb[0].mxu0
      %v629 = vpop.f32.mrb[0].mxu0
      %v630 = vadd.f32 0.0, %v629
      %v631 = vpop.f32.mrb[0].mxu0
      %632 = vmatprep.mubr.bf16.mxu0 0
      %633 = vmatmul.mubr.bf16.gmra.mrb[0].mxu0 %v504
      %v634 = vpop.f32.mrb[0].mxu0
      %v635 = vadd.f32 0.0, %v634
      %v636 = vpop.f32.mrb[0].mxu0
      %v637 = vpop.f32.mrb[0].mxu0
      %v638 = vadd.f32 0.0, %v637
      %v639 = vpop.f32.mrb[0].mxu0
      %640 = vmatprep.mubr.bf16.mxu0 0
      %641 = vmatmul.mubr.bf16.gmra.mrb[0].mxu0 %v507
      %v642 = vpop.f32.mrb[0].mxu0
      %v643 = vadd.f32 0.0, %v642
      %v644 = vpop.f32.mrb[0].mxu0
      %v645 = vpop.f32.mrb[0].mxu0
      %v646 = vadd.f32 0.0, %v645
      %v647 = vpop.f32.mrb[0].mxu0
      %648 = vmatprep.mubr.bf16.mxu0 0
      %649 = vmatmul.mubr.bf16.gmra.mrb[0].mxu0 %v510
      %v650 = vpop.f32.mrb[0].mxu0
      %v651 = vadd.f32 0.0, %v650
      %v652 = vpop.f32.mrb[0].mxu0
      %v653 = vpop.f32.mrb[0].mxu0
      %v654 = vadd.f32 0.0, %v653
      %v655 = vpop.f32.mrb[0].mxu0
      %656 = vmatprep.mubr.bf16.mxu0 0
      %657 = vmatmul.mubr.bf16.gmra.mrb[0].mxu0 %v513
      %v658 = vpop.f32.mrb[0].mxu0
      %v659 = vadd.f32 0.0, %v658
      %v660 = vpop.f32.mrb[0].mxu0
      %v661 = vpop.f32.mrb[0].mxu0
      %v662 = vadd.f32 0.0, %v661
      %v663 = vpop.f32.mrb[0].mxu0
      %664 = vmatprep.mubr.bf16.mxu0 0
      %665 = vmatmul.mubr.bf16.gmra.mrb[0].mxu0 %v516
      %v666 = vpop.f32.mrb[0].mxu0
      %v667 = vadd.f32 0.0, %v666
      %v668 = vpop.f32.mrb[0].mxu0
      %v669 = vpop.f32.mrb[0].mxu0
      %v670 = vadd.f32 0.0, %v669
      %v671 = vpop.f32.mrb[0].mxu0
      %672 = vmatprep.mubr.bf16.mxu0 0
      %673 = vmatmul.mubr.bf16.gmra.mrb[0].mxu0 %v519
      %v674 = vpop.f32.mrb[0].mxu0
      %v675 = vadd.f32 0.0, %v674
      %v676 = vpop.f32.mrb[0].mxu0
      %v677 = vpop.f32.mrb[0].mxu0
      %v678 = vadd.f32 0.0, %v677
      %v679 = vpop.f32.mrb[0].mxu0
      %680 = vmatprep.mubr.bf16.mxu0 0
      %681 = vmatmul.mubr.bf16.gmra.mrb[0].mxu0 %v522
      %v682 = vpop.f32.mrb[0].mxu0
      %v683 = vadd.f32 0.0, %v682
      %v684 = vpop.f32.mrb[0].mxu0
      %v685 = vpop.f32.mrb[0].mxu0
      %v686 = vadd.f32 0.0, %v685
      %v687 = vpop.f32.mrb[0].mxu0
      %688 = vmatprep.mubr.bf16.mxu0 0
      %689 = vmatmul.mubr.bf16.gmra.mrb[0].mxu0 %v525
      %v690 = vpop.f32.mrb[0].mxu0
      %v691 = vadd.f32 0.0, %v690
      %v692 = vpop.f32.mrb[0].mxu0
      %v693 = vpop.f32.mrb[0].mxu0
      %v694 = vadd.f32 0.0, %v693
      %v695 = vpop.f32.mrb[0].mxu0
      %696 = vmatprep.mubr.bf16.mxu0 0
      %697 = vmatmul.mubr.bf16.gmra.mrb[0].mxu0 %v528
      %v698 = vpop.f32.mrb[0].mxu0
      %v699 = vadd.f32 0.0, %v698
      %v700 = vpop.f32.mrb[0].mxu0
      %v701 = vpop.f32.mrb[0].mxu0
      %v702 = vadd.f32 0.0, %v701
      %v703 = vpop.f32.mrb[0].mxu0
      %704 = vmatprep.mubr.bf16.mxu0 0
      %705 = vmatmul.mubr.bf16.gmra.mrb[0].mxu0 %v531
      %v706 = vpop.f32.mrb[0].mxu0
      %v707 = vadd.f32 0.0, %v706
      %v708 = vpop.f32.mrb[0].mxu0
      %v709 = vpop.f32.mrb[0].mxu0
      %v710 = vadd.f32 0.0, %v709
      %v711 = vpop.f32.mrb[0].mxu0
      %712 = vmatprep.mubr.bf16.mxu0 0
      %713 = vmatmul.mubr.bf16.gmra.mrb[0].mxu0 %v534
      %v714 = vpop.f32.mrb[0].mxu0
      %v715 = vadd.f32 0.0, %v714
      %v716 = vpop.f32.mrb[0].mxu0
      %v717 = vpop.f32.mrb[0].mxu0
      %v718 = vadd.f32 0.0, %v717
      %v719 = vpop.f32.mrb[0].mxu0
      %720 = vdwg.mxu0
      %v729 = vunpack.c.l.b16 %v399
      %v730 = vunpack.c.l.b16 %v400
      %v731 = vunpack.c.l.b16 %v401
      %v732 = vunpack.c.l.b16 %v402
      %v733 = vunpack.c.l.b16 %v403
      %v734 = vunpack.c.l.b16 %v404
      %v735 = vunpack.c.l.b16 %v405
      %v736 = vunpack.c.l.b16 %v406
      %v737 = vpack.c.b16 %v730, %v729
      %v738 = vpack.c.b16 %v732, %v731
      %v739 = vpack.c.b16 %v734, %v733
      %v740 = vpack.c.b16 %v736, %v735
      %v746 = vsel %vm478, %v416, 0
      %v749 = vsel %vm478, %v417, 0
      %v752 = vsel %vm478, %v418, 0
      %v755 = vsel %vm478, %v419, 0
      %v758 = vsel %vm478, %v420, 0
      %v761 = vsel %vm478, %v421, 0
      %v764 = vsel %vm478, %v422, 0
      %v767 = vsel %vm478, %v423, 0
      %v770 = vsel %vm478, %v424, 0
      %v773 = vsel %vm478, %v425, 0
      %v776 = vsel %vm478, %v426, 0
      %v779 = vsel %vm478, %v427, 0
      %v782 = vsel %vm478, %v428, 0
      %v785 = vsel %vm478, %v429, 0
      %v788 = vsel %vm478, %v430, 0
      %v791 = vsel %vm478, %v431, 0
      %v794 = vsel %vm478, %v432, 0
      %v797 = vsel %vm478, %v433, 0
      %v800 = vsel %vm478, %v434, 0
      %802 = vmatprep.subr.bf16.mxu0 0
      %803 = vmatpush1.bf16.msra.mxu0 %v737
      %804 = vmatprep.subr.bf16.mxu0 0
      %805 = vmatpush1.bf16.msra.mxu0 %v738
      %806 = vmatprep.subr.bf16.mxu0 0
      %807 = vmatpush1.bf16.msra.mxu0 %v739
      %808 = vmatprep.subr.bf16.mxu0 0
      %809 = vmatpush1.bf16.msra.mxu0 %v740
      %810 = vmatprep.subr.bf16.mxu0 0
      %811 = vmatpush1.bf16.msra.mxu0 0
      %812 = vmatprep.subr.bf16.mxu0 0
      %813 = vmatpush1.bf16.msra.mxu0 0
      %814 = vmatprep.subr.bf16.mxu0 0
      %815 = vmatpush1.bf16.msra.mxu0 0
      %816 = vmatprep.subr.bf16.mxu0 0
      %817 = vmatpush1.bf16.msra.mxu0 0
      %818 = vmatprep.subr.bf16.mxu0 0
      %819 = vmatpush1.bf16.msra.mxu0 0
      %820 = vmatprep.subr.bf16.mxu0 0
      %821 = vmatpush1.bf16.msra.mxu0 0
      %822 = vmatprep.subr.bf16.mxu0 0
      %823 = vmatpush1.bf16.msra.mxu0 0
      %824 = vmatprep.subr.bf16.mxu0 0
      %825 = vmatpush1.bf16.msra.mxu0 0
      %826 = vmatprep.subr.bf16.mxu0 0
      %827 = vmatpush1.bf16.msra.mxu0 0
      %828 = vmatprep.subr.bf16.mxu0 0
      %829 = vmatpush1.bf16.msra.mxu0 0
      %830 = vmatprep.subr.bf16.mxu0 0
      %831 = vmatpush1.bf16.msra.mxu0 0
      %832 = vmatprep.subr.bf16.mxu0 0
      %833 = vmatpush1.bf16.msra.mxu0 0
      %834 = vmatprep.mubr.bf16.mxu0 0
      %835 = vmatmul.mubr.bf16.gmra.mrb[0].mxu0 %v746
      %v836 = vpop.f32.mrb[0].mxu0
      %v837 = vadd.f32 %v571, %v836
      %v838 = vpop.f32.mrb[0].mxu0
      %v839 = vpop.f32.mrb[0].mxu0
      %v840 = vadd.f32 %v574, %v839
      %v841 = vpop.f32.mrb[0].mxu0
      %842 = vmatprep.mubr.bf16.mxu0 0
      %843 = vmatmul.mubr.bf16.gmra.mrb[0].mxu0 %v749
      %v844 = vpop.f32.mrb[0].mxu0
      %v845 = vadd.f32 %v579, %v844
      %v846 = vpop.f32.mrb[0].mxu0
      %v847 = vpop.f32.mrb[0].mxu0
      %v848 = vadd.f32 %v582, %v847
      %v849 = vpop.f32.mrb[0].mxu0
      %850 = vmatprep.mubr.bf16.mxu0 0
      %851 = vmatmul.mubr.bf16.gmra.mrb[0].mxu0 %v752
      %v852 = vpop.f32.mrb[0].mxu0
      %v853 = vadd.f32 %v587, %v852
      %v854 = vpop.f32.mrb[0].mxu0
      %v855 = vpop.f32.mrb[0].mxu0
      %v856 = vadd.f32 %v590, %v855
      %v857 = vpop.f32.mrb[0].mxu0
      %858 = vmatprep.mubr.bf16.mxu0 0
      %859 = vmatmul.mubr.bf16.gmra.mrb[0].mxu0 %v755
      %v860 = vpop.f32.mrb[0].mxu0
      %v861 = vadd.f32 %v595, %v860
      %v862 = vpop.f32.mrb[0].mxu0
      %v863 = vpop.f32.mrb[0].mxu0
      %v864 = vadd.f32 %v598, %v863
      %v865 = vpop.f32.mrb[0].mxu0
      %866 = vmatprep.mubr.bf16.mxu0 0
      %867 = vmatmul.mubr.bf16.gmra.mrb[0].mxu0 %v758
      %v868 = vpop.f32.mrb[0].mxu0
      %v869 = vadd.f32 %v603, %v868
      %v870 = vpop.f32.mrb[0].mxu0
      %v871 = vpop.f32.mrb[0].mxu0
      %v872 = vadd.f32 %v606, %v871
      %v873 = vpop.f32.mrb[0].mxu0
      %874 = vmatprep.mubr.bf16.mxu0 0
      %875 = vmatmul.mubr.bf16.gmra.mrb[0].mxu0 %v761
      %v876 = vpop.f32.mrb[0].mxu0
      %v877 = vadd.f32 %v611, %v876
      %v878 = vpop.f32.mrb[0].mxu0
      %v879 = vpop.f32.mrb[0].mxu0
      %v880 = vadd.f32 %v614, %v879
      %v881 = vpop.f32.mrb[0].mxu0
      %882 = vmatprep.mubr.bf16.mxu0 0
      %883 = vmatmul.mubr.bf16.gmra.mrb[0].mxu0 %v764
      %v884 = vpop.f32.mrb[0].mxu0
      %v885 = vadd.f32 %v619, %v884
      %v886 = vpop.f32.mrb[0].mxu0
      %v887 = vpop.f32.mrb[0].mxu0
      %v888 = vadd.f32 %v622, %v887
      %v889 = vpop.f32.mrb[0].mxu0
      %890 = vmatprep.mubr.bf16.mxu0 0
      %891 = vmatmul.mubr.bf16.gmra.mrb[0].mxu0 %v767
      %v892 = vpop.f32.mrb[0].mxu0
      %v893 = vadd.f32 %v627, %v892
      %v894 = vpop.f32.mrb[0].mxu0
      %v895 = vpop.f32.mrb[0].mxu0
      %v896 = vadd.f32 %v630, %v895
      %v897 = vpop.f32.mrb[0].mxu0
      %898 = vmatprep.mubr.bf16.mxu0 0
      %899 = vmatmul.mubr.bf16.gmra.mrb[0].mxu0 %v770
      %v900 = vpop.f32.mrb[0].mxu0
      %v901 = vadd.f32 %v635, %v900
      %v902 = vpop.f32.mrb[0].mxu0
      %v903 = vpop.f32.mrb[0].mxu0
      %v904 = vadd.f32 %v638, %v903
      %v905 = vpop.f32.mrb[0].mxu0
      %906 = vmatprep.mubr.bf16.mxu0 0
      %907 = vmatmul.mubr.bf16.gmra.mrb[0].mxu0 %v773
      %v908 = vpop.f32.mrb[0].mxu0
      %v909 = vadd.f32 %v643, %v908
      %v910 = vpop.f32.mrb[0].mxu0
      %v911 = vpop.f32.mrb[0].mxu0
      %v912 = vadd.f32 %v646, %v911
      %v913 = vpop.f32.mrb[0].mxu0
      %914 = vmatprep.mubr.bf16.mxu0 0
      %915 = vmatmul.mubr.bf16.gmra.mrb[0].mxu0 %v776
      %v916 = vpop.f32.mrb[0].mxu0
      %v917 = vadd.f32 %v651, %v916
      %v918 = vpop.f32.mrb[0].mxu0
      %v919 = vpop.f32.mrb[0].mxu0
      %v920 = vadd.f32 %v654, %v919
      %v921 = vpop.f32.mrb[0].mxu0
      %922 = vmatprep.mubr.bf16.mxu0 0
      %923 = vmatmul.mubr.bf16.gmra.mrb[0].mxu0 %v779
      %v924 = vpop.f32.mrb[0].mxu0
      %v925 = vadd.f32 %v659, %v924
      %v926 = vpop.f32.mrb[0].mxu0
      %v927 = vpop.f32.mrb[0].mxu0
      %v928 = vadd.f32 %v662, %v927
      %v929 = vpop.f32.mrb[0].mxu0
      %930 = vmatprep.mubr.bf16.mxu0 0
      %931 = vmatmul.mubr.bf16.gmra.mrb[0].mxu0 %v782
      %v932 = vpop.f32.mrb[0].mxu0
      %v933 = vadd.f32 %v667, %v932
      %v934 = vpop.f32.mrb[0].mxu0
      %v935 = vpop.f32.mrb[0].mxu0
      %v936 = vadd.f32 %v670, %v935
      %v937 = vpop.f32.mrb[0].mxu0
      %938 = vmatprep.mubr.bf16.mxu0 0
      %939 = vmatmul.mubr.bf16.gmra.mrb[0].mxu0 %v785
      %v940 = vpop.f32.mrb[0].mxu0
      %v941 = vadd.f32 %v675, %v940
      %v942 = vpop.f32.mrb[0].mxu0
      %v943 = vpop.f32.mrb[0].mxu0
      %v944 = vadd.f32 %v678, %v943
      %v945 = vpop.f32.mrb[0].mxu0
      %946 = vmatprep.mubr.bf16.mxu0 0
      %947 = vmatmul.mubr.bf16.gmra.mrb[0].mxu0 %v788
      %v948 = vpop.f32.mrb[0].mxu0
      %v949 = vadd.f32 %v683, %v948
      %v950 = vpop.f32.mrb[0].mxu0
      %v951 = vpop.f32.mrb[0].mxu0
      %v952 = vadd.f32 %v686, %v951
      %v953 = vpop.f32.mrb[0].mxu0
      %954 = vmatprep.mubr.bf16.mxu0 0
      %955 = vmatmul.mubr.bf16.gmra.mrb[0].mxu0 %v791
      %v956 = vpop.f32.mrb[0].mxu0
      %v957 = vadd.f32 %v691, %v956
      %v958 = vpop.f32.mrb[0].mxu0
      %v959 = vpop.f32.mrb[0].mxu0
      %v960 = vadd.f32 %v694, %v959
      %v961 = vpop.f32.mrb[0].mxu0
      %962 = vmatprep.mubr.bf16.mxu0 0
      %963 = vmatmul.mubr.bf16.gmra.mrb[0].mxu0 %v794
      %v964 = vpop.f32.mrb[0].mxu0
      %v965 = vadd.f32 %v699, %v964
      %v966 = vpop.f32.mrb[0].mxu0
      %v967 = vpop.f32.mrb[0].mxu0
      %v968 = vadd.f32 %v702, %v967
      %v969 = vpop.f32.mrb[0].mxu0
      %970 = vmatprep.mubr.bf16.mxu0 0
      %971 = vmatmul.mubr.bf16.gmra.mrb[0].mxu0 %v797
      %v972 = vpop.f32.mrb[0].mxu0
      %v973 = vadd.f32 %v707, %v972
      %v974 = vpop.f32.mrb[0].mxu0
      %v975 = vpop.f32.mrb[0].mxu0
      %v976 = vadd.f32 %v710, %v975
      %v977 = vpop.f32.mrb[0].mxu0
      %978 = vmatprep.mubr.bf16.mxu0 0
      %979 = vmatmul.mubr.bf16.gmra.mrb[0].mxu0 %v800
      %v980 = vpop.f32.mrb[0].mxu0
      %v981 = vadd.f32 %v715, %v980
      %v982 = vpop.f32.mrb[0].mxu0
      %v983 = vpop.f32.mrb[0].mxu0
      %v984 = vadd.f32 %v718, %v983
      %v985 = vpop.f32.mrb[0].mxu0
      %986 = vdwg.mxu0
      %v988 = vlaneseq
      %v989 = vshrl.u32 %v988, 7
      %v990 = vsub.s32 0, %v989
      %v991 = vrot.slane %v415, %v990
      %v993 = vadd.f32 %v837, %v991
      %v994 = vadd.f32 %v840, %v991
      %v995 = vadd.f32 %v845, %v991
      %v996 = vadd.f32 %v848, %v991
      %v997 = vadd.f32 %v853, %v991
      %v998 = vadd.f32 %v856, %v991
      %v999 = vadd.f32 %v861, %v991
      %v1000 = vadd.f32 %v864, %v991
      %v1001 = vadd.f32 %v869, %v991
      %v1002 = vadd.f32 %v872, %v991
      %v1003 = vadd.f32 %v877, %v991
      %v1004 = vadd.f32 %v880, %v991
      %v1005 = vadd.f32 %v885, %v991
      %v1006 = vadd.f32 %v888, %v991
      %v1007 = vadd.f32 %v893, %v991
      %v1008 = vadd.f32 %v896, %v991
      %v1009 = vadd.f32 %v901, %v991
      %v1010 = vadd.f32 %v904, %v991
      %v1011 = vadd.f32 %v909, %v991
      %v1012 = vadd.f32 %v912, %v991
      %v1013 = vadd.f32 %v917, %v991
      %v1014 = vadd.f32 %v920, %v991
      %v1015 = vadd.f32 %v925, %v991
      %v1016 = vadd.f32 %v928, %v991
      %v1017 = vadd.f32 %v933, %v991
      %v1018 = vadd.f32 %v936, %v991
      %v1019 = vadd.f32 %v941, %v991
      %v1020 = vadd.f32 %v944, %v991
      %v1021 = vadd.f32 %v949, %v991
      %v1022 = vadd.f32 %v952, %v991
      %v1023 = vadd.f32 %v957, %v991
      %v1024 = vadd.f32 %v960, %v991
      %v1025 = vadd.f32 %v965, %v991
      %v1026 = vadd.f32 %v968, %v991
      %v1027 = vadd.f32 %v973, %v991
      %v1028 = vadd.f32 %v976, %v991
      %v1029 = vadd.f32 %v981, %v991
      %v1030 = vadd.f32 %v984, %v991
      %v1031 = vmax.f32 %v993, 0.0
      %v1032 = vmax.f32 %v994, 0.0
      %v1033 = vmax.f32 %v995, 0.0
      %v1034 = vmax.f32 %v996, 0.0
      %v1035 = vmax.f32 %v997, 0.0
      %v1036 = vmax.f32 %v998, 0.0
      %v1037 = vmax.f32 %v999, 0.0
      %v1038 = vmax.f32 %v1000, 0.0
      %v1039 = vmax.f32 %v1001, 0.0
      %v1040 = vmax.f32 %v1002, 0.0
      %v1041 = vmax.f32 %v1003, 0.0
      %v1042 = vmax.f32 %v1004, 0.0
      %v1043 = vmax.f32 %v1005, 0.0
      %v1044 = vmax.f32 %v1006, 0.0
      %v1045 = vmax.f32 %v1007, 0.0
      %v1046 = vmax.f32 %v1008, 0.0
      %v1047 = vmax.f32 %v1009, 0.0
      %v1048 = vmax.f32 %v1010, 0.0
      %v1049 = vmax.f32 %v1011, 0.0
      %v1050 = vmax.f32 %v1012, 0.0
      %v1051 = vmax.f32 %v1013, 0.0
      %v1052 = vmax.f32 %v1014, 0.0
      %v1053 = vmax.f32 %v1015, 0.0
      %v1054 = vmax.f32 %v1016, 0.0
      %v1055 = vmax.f32 %v1017, 0.0
      %v1056 = vmax.f32 %v1018, 0.0
      %v1057 = vmax.f32 %v1019, 0.0
      %v1058 = vmax.f32 %v1020, 0.0
      %v1059 = vmax.f32 %v1021, 0.0
      %v1060 = vmax.f32 %v1022, 0.0
      %v1061 = vmax.f32 %v1023, 0.0
      %v1062 = vmax.f32 %v1024, 0.0
      %v1063 = vmax.f32 %v1025, 0.0
      %v1064 = vmax.f32 %v1026, 0.0
      %v1065 = vmax.f32 %v1027, 0.0
      %v1066 = vmax.f32 %v1028, 0.0
      %v1067 = vmax.f32 %v1029, 0.0
      %v1068 = vmax.f32 %v1030, 0.0
      %v1069 = vld [vmem:[%s5] sm:$0xf]
      %v1070 = vld [vmem:[%s5 + $0x4] sm:$0xf]
      %v1071 = vld [vmem:[%s5 + $0x8] sm:$0xf]
      %v1072 = vld [vmem:[%s5 + $0xc] sm:$0xf]
      %v1073 = vld [vmem:[%s5 + $0x10] sm:$0xf]
      %v1074 = vld [vmem:[%s5 + $0x14] sm:$0xf]
      %v1075 = vld [vmem:[%s5 + $0x18] sm:$0xf]
      %v1076 = vld [vmem:[%s5 + $0x1c] sm:$0xf]
      %v1077 = vld [vmem:[%s5 + $0x20] sm:$0xf]
      %v1078 = vld [vmem:[%s5 + $0x24] sm:$0xf]
      %v1079 = vld [vmem:[%s5 + $0x28] sm:$0xf]
      %v1080 = vld [vmem:[%s5 + $0x2c] sm:$0xf]
      %v1081 = vld [vmem:[%s5 + $0x30] sm:$0xf]
      %v1082 = vld [vmem:[%s5 + $0x34] sm:$0xf]
      %v1083 = vld [vmem:[%s5 + $0x38] sm:$0xf]
      %v1084 = vld [vmem:[%s5 + $0x3c] sm:$0xf]
      %v1085 = vld [vmem:[%s6] sm:$0x1]
      %v1086 = vpack.c.bf16 %v1032, %v1031
      %v1087 = vpack.c.bf16 %v1034, %v1033
      %v1088 = vpack.c.bf16 %v1036, %v1035
      %v1089 = vpack.c.bf16 %v1038, %v1037
      %v1090 = vpack.c.bf16 %v1040, %v1039
      %v1091 = vpack.c.bf16 %v1042, %v1041
      %v1092 = vpack.c.bf16 %v1044, %v1043
      %v1093 = vpack.c.bf16 %v1046, %v1045
      %v1094 = vpack.c.bf16 %v1048, %v1047
      %v1095 = vpack.c.bf16 %v1050, %v1049
      %v1096 = vpack.c.bf16 %v1052, %v1051
      %v1097 = vpack.c.bf16 %v1054, %v1053
      %v1098 = vpack.c.bf16 %v1056, %v1055
      %v1099 = vpack.c.bf16 %v1058, %v1057
      %v1100 = vpack.c.bf16 %v1060, %v1059
      %v1101 = vpack.c.bf16 %v1062, %v1061
      %v1102 = vpack.c.bf16 %v1064, %v1063
      %v1103 = vpack.c.bf16 %v1066, %v1065
      %v1104 = vpack.c.bf16 %v1068, %v1067
      %v1106 = vlaneseq
      %v1107 = vshrl.u32 %v1106, 7
      %v1108 = vsub.s32 0, %v1107
      %v1109 = vrot.slane %v1085, %v1108
      %v1127 = vunpack.c.l.b16 %v1069
      %v1128 = vunpack.c.l.b16 %v1070
      %v1129 = vunpack.c.l.b16 %v1071
      %v1130 = vunpack.c.l.b16 %v1072
      %v1131 = vunpack.c.l.b16 %v1073
      %v1132 = vunpack.c.l.b16 %v1074
      %v1133 = vunpack.c.l.b16 %v1075
      %v1134 = vunpack.c.l.b16 %v1076
      %v1135 = vunpack.c.l.b16 %v1077
      %v1136 = vunpack.c.l.b16 %v1078
      %v1137 = vunpack.c.l.b16 %v1079
      %v1138 = vunpack.c.l.b16 %v1080
      %v1139 = vunpack.c.l.b16 %v1081
      %v1140 = vunpack.c.l.b16 %v1082
      %v1141 = vunpack.c.l.b16 %v1083
      %v1142 = vunpack.c.l.b16 %v1084
      %v1143 = vpack.c.b16 %v1128, %v1127
      %v1144 = vpack.c.b16 %v1130, %v1129
      %v1145 = vpack.c.b16 %v1132, %v1131
      %v1146 = vpack.c.b16 %v1134, %v1133
      %v1147 = vpack.c.b16 %v1136, %v1135
      %v1148 = vpack.c.b16 %v1138, %v1137
      %v1149 = vpack.c.b16 %v1140, %v1139
      %v1150 = vpack.c.b16 %v1142, %v1141
      %1159 = vmatprep.subr.bf16.mxu0 0
      %1160 = vmatpush1.bf16.msra.mxu0 %v1143
      %1161 = vmatprep.subr.bf16.mxu0 0
      %1162 = vmatpush1.bf16.msra.mxu0 %v1144
      %1163 = vmatprep.subr.bf16.mxu0 0
      %1164 = vmatpush1.bf16.msra.mxu0 %v1145
      %1165 = vmatprep.subr.bf16.mxu0 0
      %1166 = vmatpush1.bf16.msra.mxu0 %v1146
      %1167 = vmatprep.subr.bf16.mxu0 0
      %1168 = vmatpush1.bf16.msra.mxu0 %v1147
      %1169 = vmatprep.subr.bf16.mxu0 0
      %1170 = vmatpush1.bf16.msra.mxu0 %v1148
      %1171 = vmatprep.subr.bf16.mxu0 0
      %1172 = vmatpush1.bf16.msra.mxu0 %v1149
      %1173 = vmatprep.subr.bf16.mxu0 0
      %1174 = vmatpush1.bf16.msra.mxu0 %v1150
      %1175 = vmatprep.subr.bf16.mxu0 0
      %1176 = vmatpush1.bf16.msra.mxu0 0
      %1177 = vmatprep.subr.bf16.mxu0 0
      %1178 = vmatpush1.bf16.msra.mxu0 0
      %1179 = vmatprep.subr.bf16.mxu0 0
      %1180 = vmatpush1.bf16.msra.mxu0 0
      %1181 = vmatprep.subr.bf16.mxu0 0
      %1182 = vmatpush1.bf16.msra.mxu0 0
      %1183 = vmatprep.subr.bf16.mxu0 0
      %1184 = vmatpush1.bf16.msra.mxu0 0
      %1185 = vmatprep.subr.bf16.mxu0 0
      %1186 = vmatpush1.bf16.msra.mxu0 0
      %1187 = vmatprep.subr.bf16.mxu0 0
      %1188 = vmatpush1.bf16.msra.mxu0 0
      %1189 = vmatprep.subr.bf16.mxu0 0
      %1190 = vmatpush1.bf16.msra.mxu0 0
      %1191 = vmatprep.mubr.bf16.mxu0 0
      %1192 = vmatmul.mubr.bf16.gmra.mrb[0].mxu0 %v1086
      %v1193 = vpop.f32.mrb[0].mxu0
      %v1194 = vadd.f32 %v1109, %v1193
      %v1195 = vpop.f32.mrb[0].mxu0
      %v1196 = vpop.f32.mrb[0].mxu0
      %v1197 = vadd.f32 %v1109, %v1196
      %v1198 = vpop.f32.mrb[0].mxu0
      %1199 = vmatprep.mubr.bf16.mxu0 0
      %1200 = vmatmul.mubr.bf16.gmra.mrb[0].mxu0 %v1087
      %v1201 = vpop.f32.mrb[0].mxu0
      %v1202 = vadd.f32 %v1109, %v1201
      %v1203 = vpop.f32.mrb[0].mxu0
      %v1204 = vpop.f32.mrb[0].mxu0
      %v1205 = vadd.f32 %v1109, %v1204
      %v1206 = vpop.f32.mrb[0].mxu0
      %1207 = vmatprep.mubr.bf16.mxu0 0
      %1208 = vmatmul.mubr.bf16.gmra.mrb[0].mxu0 %v1088
      %v1209 = vpop.f32.mrb[0].mxu0
      %v1210 = vadd.f32 %v1109, %v1209
      %v1211 = vpop.f32.mrb[0].mxu0
      %v1212 = vpop.f32.mrb[0].mxu0
      %v1213 = vadd.f32 %v1109, %v1212
      %v1214 = vpop.f32.mrb[0].mxu0
      %1215 = vmatprep.mubr.bf16.mxu0 0
      %1216 = vmatmul.mubr.bf16.gmra.mrb[0].mxu0 %v1089
      %v1217 = vpop.f32.mrb[0].mxu0
      %v1218 = vadd.f32 %v1109, %v1217
      %v1219 = vpop.f32.mrb[0].mxu0
      %v1220 = vpop.f32.mrb[0].mxu0
      %v1221 = vadd.f32 %v1109, %v1220
      %v1222 = vpop.f32.mrb[0].mxu0
      %1223 = vmatprep.mubr.bf16.mxu0 0
      %1224 = vmatmul.mubr.bf16.gmra.mrb[0].mxu0 %v1090
      %v1225 = vpop.f32.mrb[0].mxu0
      %v1226 = vadd.f32 %v1109, %v1225
      %v1227 = vpop.f32.mrb[0].mxu0
      %v1228 = vpop.f32.mrb[0].mxu0
      %v1229 = vadd.f32 %v1109, %v1228
      %v1230 = vpop.f32.mrb[0].mxu0
      %1231 = vmatprep.mubr.bf16.mxu0 0
      %1232 = vmatmul.mubr.bf16.gmra.mrb[0].mxu0 %v1091
      %v1233 = vpop.f32.mrb[0].mxu0
      %v1234 = vadd.f32 %v1109, %v1233
      %v1235 = vpop.f32.mrb[0].mxu0
      %v1236 = vpop.f32.mrb[0].mxu0
      %v1237 = vadd.f32 %v1109, %v1236
      %v1238 = vpop.f32.mrb[0].mxu0
      %1239 = vmatprep.mubr.bf16.mxu0 0
      %1240 = vmatmul.mubr.bf16.gmra.mrb[0].mxu0 %v1092
      %v1241 = vpop.f32.mrb[0].mxu0
      %v1242 = vadd.f32 %v1109, %v1241
      %v1243 = vpop.f32.mrb[0].mxu0
      %v1244 = vpop.f32.mrb[0].mxu0
      %v1245 = vadd.f32 %v1109, %v1244
      %v1246 = vpop.f32.mrb[0].mxu0
      %1247 = vmatprep.mubr.bf16.mxu0 0
      %1248 = vmatmul.mubr.bf16.gmra.mrb[0].mxu0 %v1093
      %v1249 = vpop.f32.mrb[0].mxu0
      %v1250 = vadd.f32 %v1109, %v1249
      %v1251 = vpop.f32.mrb[0].mxu0
      %v1252 = vpop.f32.mrb[0].mxu0
      %v1253 = vadd.f32 %v1109, %v1252
      %v1254 = vpop.f32.mrb[0].mxu0
      %1255 = vmatprep.mubr.bf16.mxu0 0
      %1256 = vmatmul.mubr.bf16.gmra.mrb[0].mxu0 %v1094
      %v1257 = vpop.f32.mrb[0].mxu0
      %v1258 = vadd.f32 %v1109, %v1257
      %v1259 = vpop.f32.mrb[0].mxu0
      %v1260 = vpop.f32.mrb[0].mxu0
      %v1261 = vadd.f32 %v1109, %v1260
      %v1262 = vpop.f32.mrb[0].mxu0
      %1263 = vmatprep.mubr.bf16.mxu0 0
      %1264 = vmatmul.mubr.bf16.gmra.mrb[0].mxu0 %v1095
      %v1265 = vpop.f32.mrb[0].mxu0
      %v1266 = vadd.f32 %v1109, %v1265
      %v1267 = vpop.f32.mrb[0].mxu0
      %v1268 = vpop.f32.mrb[0].mxu0
      %v1269 = vadd.f32 %v1109, %v1268
      %v1270 = vpop.f32.mrb[0].mxu0
      %1271 = vmatprep.mubr.bf16.mxu0 0
      %1272 = vmatmul.mubr.bf16.gmra.mrb[0].mxu0 %v1096
      %v1273 = vpop.f32.mrb[0].mxu0
      %v1274 = vadd.f32 %v1109, %v1273
      %v1275 = vpop.f32.mrb[0].mxu0
      %v1276 = vpop.f32.mrb[0].mxu0
      %v1277 = vadd.f32 %v1109, %v1276
      %v1278 = vpop.f32.mrb[0].mxu0
      %1279 = vmatprep.mubr.bf16.mxu0 0
      %1280 = vmatmul.mubr.bf16.gmra.mrb[0].mxu0 %v1097
      %v1281 = vpop.f32.mrb[0].mxu0
      %v1282 = vadd.f32 %v1109, %v1281
      %v1283 = vpop.f32.mrb[0].mxu0
      %v1284 = vpop.f32.mrb[0].mxu0
      %v1285 = vadd.f32 %v1109, %v1284
      %v1286 = vpop.f32.mrb[0].mxu0
      %1287 = vmatprep.mubr.bf16.mxu0 0
      %1288 = vmatmul.mubr.bf16.gmra.mrb[0].mxu0 %v1098
      %v1289 = vpop.f32.mrb[0].mxu0
      %v1290 = vadd.f32 %v1109, %v1289
      %v1291 = vpop.f32.mrb[0].mxu0
      %v1292 = vpop.f32.mrb[0].mxu0
      %v1293 = vadd.f32 %v1109, %v1292
      %v1294 = vpop.f32.mrb[0].mxu0
      %1295 = vmatprep.mubr.bf16.mxu0 0
      %1296 = vmatmul.mubr.bf16.gmra.mrb[0].mxu0 %v1099
      %v1297 = vpop.f32.mrb[0].mxu0
      %v1298 = vadd.f32 %v1109, %v1297
      %v1299 = vpop.f32.mrb[0].mxu0
      %v1300 = vpop.f32.mrb[0].mxu0
      %v1301 = vadd.f32 %v1109, %v1300
      %v1302 = vpop.f32.mrb[0].mxu0
      %1303 = vmatprep.mubr.bf16.mxu0 0
      %1304 = vmatmul.mubr.bf16.gmra.mrb[0].mxu0 %v1100
      %v1305 = vpop.f32.mrb[0].mxu0
      %v1306 = vadd.f32 %v1109, %v1305
      %v1307 = vpop.f32.mrb[0].mxu0
      %v1308 = vpop.f32.mrb[0].mxu0
      %v1309 = vadd.f32 %v1109, %v1308
      %v1310 = vpop.f32.mrb[0].mxu0
      %1311 = vmatprep.mubr.bf16.mxu0 0
      %1312 = vmatmul.mubr.bf16.gmra.mrb[0].mxu0 %v1101
      %v1313 = vpop.f32.mrb[0].mxu0
      %v1314 = vadd.f32 %v1109, %v1313
      %v1315 = vpop.f32.mrb[0].mxu0
      %v1316 = vpop.f32.mrb[0].mxu0
      %v1317 = vadd.f32 %v1109, %v1316
      %v1318 = vpop.f32.mrb[0].mxu0
      %1319 = vmatprep.mubr.bf16.mxu0 0
      %1320 = vmatmul.mubr.bf16.gmra.mrb[0].mxu0 %v1102
      %v1321 = vpop.f32.mrb[0].mxu0
      %v1322 = vadd.f32 %v1109, %v1321
      %v1323 = vpop.f32.mrb[0].mxu0
      %v1324 = vpop.f32.mrb[0].mxu0
      %v1325 = vadd.f32 %v1109, %v1324
      %v1326 = vpop.f32.mrb[0].mxu0
      %1327 = vmatprep.mubr.bf16.mxu0 0
      %1328 = vmatmul.mubr.bf16.gmra.mrb[0].mxu0 %v1103
      %v1329 = vpop.f32.mrb[0].mxu0
      %v1330 = vadd.f32 %v1109, %v1329
      %v1331 = vpop.f32.mrb[0].mxu0
      %v1332 = vpop.f32.mrb[0].mxu0
      %v1333 = vadd.f32 %v1109, %v1332
      %v1334 = vpop.f32.mrb[0].mxu0
      %1335 = vmatprep.mubr.bf16.mxu0 0
      %1336 = vmatmul.mubr.bf16.gmra.mrb[0].mxu0 %v1104
      %v1337 = vpop.f32.mrb[0].mxu0
      %v1338 = vadd.f32 %v1109, %v1337
      %v1339 = vpop.f32.mrb[0].mxu0
      %v1340 = vpop.f32.mrb[0].mxu0
      %v1341 = vadd.f32 %v1109, %v1340
      %v1342 = vpop.f32.mrb[0].mxu0
      %1343 = vdwg.mxu0
      %v1344 = vmax.f32 %v1194, 0.0
      %v1345 = vmax.f32 %v1197, 0.0
      %v1346 = vmax.f32 %v1202, 0.0
      %v1347 = vmax.f32 %v1205, 0.0
      %v1348 = vmax.f32 %v1210, 0.0
      %v1349 = vmax.f32 %v1213, 0.0
      %v1350 = vmax.f32 %v1218, 0.0
      %v1351 = vmax.f32 %v1221, 0.0
      %v1352 = vmax.f32 %v1226, 0.0
      %v1353 = vmax.f32 %v1229, 0.0
      %v1354 = vmax.f32 %v1234, 0.0
      %v1355 = vmax.f32 %v1237, 0.0
      %v1356 = vmax.f32 %v1242, 0.0
      %v1357 = vmax.f32 %v1245, 0.0
      %v1358 = vmax.f32 %v1250, 0.0
      %v1359 = vmax.f32 %v1253, 0.0
      %v1360 = vmax.f32 %v1258, 0.0
      %v1361 = vmax.f32 %v1261, 0.0
      %v1362 = vmax.f32 %v1266, 0.0
      %v1363 = vmax.f32 %v1269, 0.0
      %v1364 = vmax.f32 %v1274, 0.0
      %v1365 = vmax.f32 %v1277, 0.0
      %v1366 = vmax.f32 %v1282, 0.0
      %v1367 = vmax.f32 %v1285, 0.0
      %v1368 = vmax.f32 %v1290, 0.0
      %v1369 = vmax.f32 %v1293, 0.0
      %v1370 = vmax.f32 %v1298, 0.0
      %v1371 = vmax.f32 %v1301, 0.0
      %v1372 = vmax.f32 %v1306, 0.0
      %v1373 = vmax.f32 %v1309, 0.0
      %v1374 = vmax.f32 %v1314, 0.0
      %v1375 = vmax.f32 %v1317, 0.0
      %v1376 = vmax.f32 %v1322, 0.0
      %v1377 = vmax.f32 %v1325, 0.0
      %v1378 = vmax.f32 %v1330, 0.0
      %v1379 = vmax.f32 %v1333, 0.0
      %v1380 = vmax.f32 %v1338, 0.0
      %v1381 = vmax.f32 %v1341, 0.0
      %v1382 = vld [vmem:[%s7] sm:$0xf]
      %v1383 = vld [vmem:[%s7 + $0x4] sm:$0xf]
      %v1384 = vld [vmem:[%s7 + $0x8] sm:$0xf]
      %v1385 = vld [vmem:[%s7 + $0xc] sm:$0xf]
      %v1386 = vld [vmem:[%s7 + $0x10] sm:$0xf]
      %v1387 = vld [vmem:[%s7 + $0x14] sm:$0xf]
      %v1388 = vld [vmem:[%s7 + $0x18] sm:$0xf]
      %v1389 = vld [vmem:[%s7 + $0x1c] sm:$0xf]
      %v1390 = vld [vmem:[%s7 + $0x20] sm:$0xf]
      %v1391 = vld [vmem:[%s7 + $0x24] sm:$0xf]
      %v1392 = vld [vmem:[%s7 + $0x28] sm:$0xf]
      %v1393 = vld [vmem:[%s7 + $0x2c] sm:$0xf]
      %v1394 = vld [vmem:[%s7 + $0x30] sm:$0xf]
      %v1395 = vld [vmem:[%s7 + $0x34] sm:$0xf]
      %v1396 = vld [vmem:[%s7 + $0x38] sm:$0xf]
      %v1397 = vld [vmem:[%s7 + $0x3c] sm:$0xf]
      %v1398 = vld [vmem:[#allocation2] sm:$0x1]
      %v1399 = vadd.f32 %v1344, %v1363
      %v1400 = vadd.f32 %v1345, %v1364
      %v1401 = vadd.f32 %v1346, %v1365
      %v1402 = vadd.f32 %v1347, %v1366
      %v1403 = vadd.f32 %v1348, %v1367
      %v1404 = vadd.f32 %v1349, %v1368
      %v1405 = vadd.f32 %v1350, %v1369
      %v1406 = vadd.f32 %v1351, %v1370
      %v1407 = vadd.f32 %v1352, %v1371
      %v1408 = vadd.f32 %v1353, %v1372
      %v1409 = vadd.f32 %v1354, %v1373
      %v1410 = vadd.f32 %v1355, %v1374
      %v1411 = vadd.f32 %v1356, %v1375
      %v1412 = vadd.f32 %v1357, %v1376
      %v1413 = vadd.f32 %v1358, %v1377
      %v1414 = vadd.f32 %v1359, %v1378
      %v1415 = vadd.f32 %v1360, %v1379
      %v1416 = vadd.f32 %v1361, %v1380
      %v1417 = vadd.f32 %v1362, %v1381
      %v1418 = vmul.f32 %v1399, 0.5
      %v1419 = vmul.f32 %v1400, 0.5
      %v1420 = vmul.f32 %v1401, 0.5
      %v1421 = vmul.f32 %v1402, 0.5
      %v1422 = vmul.f32 %v1403, 0.5
      %v1423 = vmul.f32 %v1404, 0.5
      %v1424 = vmul.f32 %v1405, 0.5
      %v1425 = vmul.f32 %v1406, 0.5
      %v1426 = vmul.f32 %v1407, 0.5
      %v1427 = vmul.f32 %v1408, 0.5
      %v1428 = vmul.f32 %v1409, 0.5
      %v1429 = vmul.f32 %v1410, 0.5
      %v1430 = vmul.f32 %v1411, 0.5
      %v1431 = vmul.f32 %v1412, 0.5
      %v1432 = vmul.f32 %v1413, 0.5
      %v1433 = vmul.f32 %v1414, 0.5
      %v1434 = vmul.f32 %v1415, 0.5
      %v1435 = vmul.f32 %v1416, 0.5
      %v1436 = vmul.f32 %v1417, 0.5
      %v1437 = vpack.c.bf16 %v1419, %v1418
      %v1438 = vpack.c.bf16 %v1421, %v1420
      %v1439 = vpack.c.bf16 %v1423, %v1422
      %v1440 = vpack.c.bf16 %v1425, %v1424
      %v1441 = vpack.c.bf16 %v1427, %v1426
      %v1442 = vpack.c.bf16 %v1429, %v1428
      %v1443 = vpack.c.bf16 %v1431, %v1430
      %v1444 = vpack.c.bf16 %v1433, %v1432
      %v1445 = vpack.c.bf16 %v1435, %v1434
      %v1446 = vpack.c.bf16 %v1436, %v1436
      %v1448 = vlaneseq
      %v1449 = vshrl.u32 %v1448, 7
      %v1450 = vsub.s32 0, %v1449
      %v1451 = vrot.slane %v1398, %v1450
      %v1469 = vunpack.c.l.b16 %v1382
      %v1470 = vunpack.c.l.b16 %v1383
      %v1471 = vunpack.c.l.b16 %v1384
      %v1472 = vunpack.c.l.b16 %v1385
      %v1473 = vunpack.c.l.b16 %v1386
      %v1474 = vunpack.c.l.b16 %v1387
      %v1475 = vunpack.c.l.b16 %v1388
      %v1476 = vunpack.c.l.b16 %v1389
      %v1477 = vunpack.c.l.b16 %v1390
      %v1478 = vunpack.c.l.b16 %v1391
      %v1479 = vunpack.c.l.b16 %v1392
      %v1480 = vunpack.c.l.b16 %v1393
      %v1481 = vunpack.c.l.b16 %v1394
      %v1482 = vunpack.c.l.b16 %v1395
      %v1483 = vunpack.c.l.b16 %v1396
      %v1484 = vunpack.c.l.b16 %v1397
      %v1485 = vpack.c.b16 %v1470, %v1469
      %v1486 = vpack.c.b16 %v1472, %v1471
      %v1487 = vpack.c.b16 %v1474, %v1473
      %v1488 = vpack.c.b16 %v1476, %v1475
      %v1489 = vpack.c.b16 %v1478, %v1477
      %v1490 = vpack.c.b16 %v1480, %v1479
      %v1491 = vpack.c.b16 %v1482, %v1481
      %v1492 = vpack.c.b16 %v1484, %v1483
      %1501 = vmatprep.subr.bf16.mxu0 0
      %1502 = vmatpush1.bf16.msra.mxu0 %v1485
      %1503 = vmatprep.subr.bf16.mxu0 0
      %1504 = vmatpush1.bf16.msra.mxu0 %v1486
      %1505 = vmatprep.subr.bf16.mxu0 0
      %1506 = vmatpush1.bf16.msra.mxu0 %v1487
      %1507 = vmatprep.subr.bf16.mxu0 0
      %1508 = vmatpush1.bf16.msra.mxu0 %v1488
      %1509 = vmatprep.subr.bf16.mxu0 0
      %1510 = vmatpush1.bf16.msra.mxu0 %v1489
      %1511 = vmatprep.subr.bf16.mxu0 0
      %1512 = vmatpush1.bf16.msra.mxu0 %v1490
      %1513 = vmatprep.subr.bf16.mxu0 0
      %1514 = vmatpush1.bf16.msra.mxu0 %v1491
      %1515 = vmatprep.subr.bf16.mxu0 0
      %1516 = vmatpush1.bf16.msra.mxu0 %v1492
      %1517 = vmatprep.subr.bf16.mxu0 0
      %1518 = vmatpush1.bf16.msra.mxu0 0
      %1519 = vmatprep.subr.bf16.mxu0 0
      %1520 = vmatpush1.bf16.msra.mxu0 0
      %1521 = vmatprep.subr.bf16.mxu0 0
      %1522 = vmatpush1.bf16.msra.mxu0 0
      %1523 = vmatprep.subr.bf16.mxu0 0
      %1524 = vmatpush1.bf16.msra.mxu0 0
      %1525 = vmatprep.subr.bf16.mxu0 0
      %1526 = vmatpush1.bf16.msra.mxu0 0
      %1527 = vmatprep.subr.bf16.mxu0 0
      %1528 = vmatpush1.bf16.msra.mxu0 0
      %1529 = vmatprep.subr.bf16.mxu0 0
      %1530 = vmatpush1.bf16.msra.mxu0 0
      %1531 = vmatprep.subr.bf16.mxu0 0
      %1532 = vmatpush1.bf16.msra.mxu0 0
      %1533 = vmatprep.mubr.bf16.mxu0 0
      %1534 = vmatmul.mubr.bf16.gmra.mrb[0].mxu0 %v1437
      %v1535 = vpop.f32.mrb[0].mxu0
      %v1536 = vadd.f32 %v1451, %v1535
      %v1537 = vpop.f32.mrb[0].mxu0
      %v1538 = vpop.f32.mrb[0].mxu0
      %v1539 = vadd.f32 %v1451, %v1538
      %v1540 = vpop.f32.mrb[0].mxu0
      %1541 = vmatprep.mubr.bf16.mxu0 0
      %1542 = vmatmul.mubr.bf16.gmra.mrb[0].mxu0 %v1438
      %v1543 = vpop.f32.mrb[0].mxu0
      %v1544 = vadd.f32 %v1451, %v1543
      %v1545 = vpop.f32.mrb[0].mxu0
      %v1546 = vpop.f32.mrb[0].mxu0
      %v1547 = vadd.f32 %v1451, %v1546
      %v1548 = vpop.f32.mrb[0].mxu0
      %1549 = vmatprep.mubr.bf16.mxu0 0
      %1550 = vmatmul.mubr.bf16.gmra.mrb[0].mxu0 %v1439
      %v1551 = vpop.f32.mrb[0].mxu0
      %v1552 = vadd.f32 %v1451, %v1551
      %v1553 = vpop.f32.mrb[0].mxu0
      %v1554 = vpop.f32.mrb[0].mxu0
      %v1555 = vadd.f32 %v1451, %v1554
      %v1556 = vpop.f32.mrb[0].mxu0
      %1557 = vmatprep.mubr.bf16.mxu0 0
      %1558 = vmatmul.mubr.bf16.gmra.mrb[0].mxu0 %v1440
      %v1559 = vpop.f32.mrb[0].mxu0
      %v1560 = vadd.f32 %v1451, %v1559
      %v1561 = vpop.f32.mrb[0].mxu0
      %v1562 = vpop.f32.mrb[0].mxu0
      %v1563 = vadd.f32 %v1451, %v1562
      %v1564 = vpop.f32.mrb[0].mxu0
      %1565 = vmatprep.mubr.bf16.mxu0 0
      %1566 = vmatmul.mubr.bf16.gmra.mrb[0].mxu0 %v1441
      %v1567 = vpop.f32.mrb[0].mxu0
      %v1568 = vadd.f32 %v1451, %v1567
      %v1569 = vpop.f32.mrb[0].mxu0
      %v1570 = vpop.f32.mrb[0].mxu0
      %v1571 = vadd.f32 %v1451, %v1570
      %v1572 = vpop.f32.mrb[0].mxu0
      %1573 = vmatprep.mubr.bf16.mxu0 0
      %1574 = vmatmul.mubr.bf16.gmra.mrb[0].mxu0 %v1442
      %v1575 = vpop.f32.mrb[0].mxu0
      %v1576 = vadd.f32 %v1451, %v1575
      %v1577 = vpop.f32.mrb[0].mxu0
      %v1578 = vpop.f32.mrb[0].mxu0
      %v1579 = vadd.f32 %v1451, %v1578
      %v1580 = vpop.f32.mrb[0].mxu0
      %1581 = vmatprep.mubr.bf16.mxu0 0
      %1582 = vmatmul.mubr.bf16.gmra.mrb[0].mxu0 %v1443
      %v1583 = vpop.f32.mrb[0].mxu0
      %v1584 = vadd.f32 %v1451, %v1583
      %v1585 = vpop.f32.mrb[0].mxu0
      %v1586 = vpop.f32.mrb[0].mxu0
      %v1587 = vadd.f32 %v1451, %v1586
      %v1588 = vpop.f32.mrb[0].mxu0
      %1589 = vmatprep.mubr.bf16.mxu0 0
      %1590 = vmatmul.mubr.bf16.gmra.mrb[0].mxu0 %v1444
      %v1591 = vpop.f32.mrb[0].mxu0
      %v1592 = vadd.f32 %v1451, %v1591
      %v1593 = vpop.f32.mrb[0].mxu0
      %v1594 = vpop.f32.mrb[0].mxu0
      %v1595 = vadd.f32 %v1451, %v1594
      %v1596 = vpop.f32.mrb[0].mxu0
      %1597 = vmatprep.mubr.bf16.mxu0 0
      %1598 = vmatmul.mubr.bf16.gmra.mrb[0].mxu0 %v1445
      %v1599 = vpop.f32.mrb[0].mxu0
      %v1600 = vadd.f32 %v1451, %v1599
      %v1601 = vpop.f32.mrb[0].mxu0
      %v1602 = vpop.f32.mrb[0].mxu0
      %v1603 = vadd.f32 %v1451, %v1602
      %v1604 = vpop.f32.mrb[0].mxu0
      %1605 = vmatprep.mubr.bf16.mxu0 0
      %1606 = vmatmul.mubr.bf16.gmra.mrb[0].mxu0 %v1446
      %v1607 = vpop.f32.mrb[0].mxu0
      %v1608 = vadd.f32 %v1451, %v1607
      %v1609 = vpop.f32.mrb[0].mxu0
      %v1610 = vpop.f32.mrb[0].mxu0
      %v1611 = vpop.f32.mrb[0].mxu0
      %1612 = vdwg.mxu0
      %vm1613 = vcmask 7168
      %1614 = vst.msk [vmem:[%s358] sm:$0xff] %vm1613, %v1536
      %1615 = vst.msk [vmem:[%s358 + $0x8] sm:$0xff] %vm1613, %v1539
      %1616 = vst.msk [vmem:[%s358 + $0x10] sm:$0xff] %vm1613, %v1544
      %1617 = vst.msk [vmem:[%s358 + $0x18] sm:$0xff] %vm1613, %v1547
      %1618 = vst.msk [vmem:[%s358 + $0x20] sm:$0xff] %vm1613, %v1552
      %1619 = vst.msk [vmem:[%s358 + $0x28] sm:$0xff] %vm1613, %v1555
      %1620 = vst.msk [vmem:[%s358 + $0x30] sm:$0xff] %vm1613, %v1560
      %1621 = vst.msk [vmem:[%s358 + $0x38] sm:$0xff] %vm1613, %v1563
      %1622 = vst.msk [vmem:[%s358 + $0x40] sm:$0xff] %vm1613, %v1568
      %1623 = vst.msk [vmem:[%s358 + $0x48] sm:$0xff] %vm1613, %v1571
      %1624 = vst.msk [vmem:[%s358 + $0x50] sm:$0xff] %vm1613, %v1576
      %1625 = vst.msk [vmem:[%s358 + $0x58] sm:$0xff] %vm1613, %v1579
      %1626 = vst.msk [vmem:[%s358 + $0x60] sm:$0xff] %vm1613, %v1584
      %1627 = vst.msk [vmem:[%s358 + $0x68] sm:$0xff] %vm1613, %v1587
      %1628 = vst.msk [vmem:[%s358 + $0x70] sm:$0xff] %vm1613, %v1592
      %1629 = vst.msk [vmem:[%s358 + $0x78] sm:$0xff] %vm1613, %v1595
      %1630 = vst.msk [vmem:[%s358 + $0x80] sm:$0xff] %vm1613, %v1600
      %1631 = vst.msk [vmem:[%s358 + $0x88] sm:$0xff] %vm1613, %v1603
      %1632 = vst.msk [vmem:[%s358 + $0x90] sm:$0xff] %vm1613, %v1608
      %s1633 = smul.u32 19, %s22
      %p1634 = scmp.lt.s32.totalorder %s1633, 37
      %s1635 = scalar_select %p1634, %s1633, 37
      %s1636 = smul.addr %s1635, 8
      %s1637 = scalar_lea.vmem %s9, %s1636
      // Predicated region
      $region57: #{tpu_custom_call.1} parent=55 // pred_check
        %p1638 = pneg %p239
      $region58: #{tpu_custom_call.1} parent=55 // pred_check_branch
        %1640 = sbr.rel (%p1638) target = $region60
      $region59: #{tpu_custom_call.1} parent=55 // pred_region
        %s1641 = smul.u32 19, %s22
      $region60: #{tpu_custom_call.1} parent=55 // pred_fallthru
        _
    $region56: #{tpu_custom_call.1} parent=5 // pred_fallthru
      _
    %p1642 = scmp.le.s32.totalorder 2, %s17
    // Predicated region
    $region61: #{tpu_custom_call.1} parent=5 // pred_check
      %p1643 = pneg %p1642
    $region62: #{tpu_custom_call.1} parent=5 // pred_check_branch
      %1645 = sbr.rel (%p1643) target = $region64
    $region63: #{tpu_custom_call.1} parent=5 // pred_region
      %s1646 = ssub.s32 %s17, 2
      // Predicated region
      $region65: #{tpu_custom_call.1} parent=63 // pred_check
        %p1647 = pneg %p245
      $region66: #{tpu_custom_call.1} parent=63 // pred_check_branch
        %1649 = sbr.rel (%p1647) target = $region68
      $region67: #{tpu_custom_call.1} parent=63 // pred_region
        %s1650 = smul.u32 19, %s23
        %p1651 = scmp.lt.s32.totalorder %s1650, 37
        %s1652 = scalar_select %p1651, %s1650, 37
        %s1653 = smul.addr %s1652, 8
        %s1654 = scalar_lea.vmem %s9, %s1653
      $region68: #{tpu_custom_call.1} parent=63 // pred_fallthru
        _
    $region64: #{tpu_custom_call.1} parent=5 // pred_fallthru
      _
  $region6: #{tpu_custom_call.1} parent=0 // loop_footer
    %s21 = sadd.s32 1, %s17
  $region7: #{tpu_custom_call.1} parent=0 // loop_footer_branch
    %16 = sbr.rel target = $region3
  $region8: #{tpu_custom_call.1} parent=0 // loop_exit
    _

</llo_original>
